<compile_context>
chip_gen: v6e
topology: v6e:2x2x1
jax: 0.10.0
libtpu: 0.0.40
codegen_flags: <defaults>
</compile_context>

<pallas_src>
import math

import jax
import jax.numpy as jnp
from jax import lax
from jax.experimental import pallas as pl
from jax.experimental.pallas import tpu as pltpu  # noqa: F401  (TPU backend)
from jax.scipy.special import erf

# ---- model config (small, consistent with the module) -----------------------
B, T, C = 2, 8, 32
N_HEAD = 4
HEAD_DIM = C // N_HEAD
HALF = HEAD_DIM // 2
N_LAYER = 2
ATTN_SCALE = 1.0 / math.sqrt(2 * N_LAYER)
SM_SCALE = 1.0 / math.sqrt(HEAD_DIM)
EPS = 1e-6
NEG_INF = -1e30


# ---- fused Block kernel ------------------------------------------------------
def _rms(x):
    # x is already f32
    return x * lax.rsqrt(jnp.mean(x * x, axis=-1, keepdims=True) + EPS)


def _block_kernel(x_ref, wqkv_ref, wo_ref, wfc_ref, wproj_ref, cos_ref, sin_ref, o_ref):
    """Entire Block forward in one kernel.

    x_ref:     (B*T, C)
    wqkv_ref:  (C, 3C)   = [Wq^T * sm_scale | Wk^T | Wv^T]
    wo_ref:    (C, C)    = Wo^T * attn_scale
    wfc_ref:   (C, 4C)   = Wfc^T
    wproj_ref: (4C, C)   = Wproj^T
    cos/sin:   (T, HEAD_DIM // 2)
    o_ref:     (B*T, C)
    """
    x = x_ref[...].astype(jnp.float32)                                   # (BT, C)

    # ----------------------- attention branch -----------------------
    xn = _rms(x)
    qkv = jnp.dot(xn, wqkv_ref[...], preferred_element_type=jnp.float32)  # (BT, 3C)

    cos = cos_ref[...][None, :, :]                                        # (1, T, HALF)
    sin = sin_ref[...][None, :, :]

    # causal mask, shared across heads; finite fill so a fully-masked row
    # can never produce NaN.
    row = lax.broadcasted_iota(jnp.int32, (T, T), 0)
    col = lax.broadcasted_iota(jnp.int32, (T, T), 1)
    causal = (col <= row)[None, :, :]                                     # (1, T, T)

    head_outs = []
    for h in range(N_HEAD):  # static unroll (no grid-step overhead)
        q = qkv[:, h * HEAD_DIM:(h + 1) * HEAD_DIM].reshape(B, T, HEAD_DIM)
        k = qkv[:, C + h * HEAD_DIM:C + (h + 1) * HEAD_DIM].reshape(B, T, HEAD_DIM)
        v = qkv[:, 2 * C + h * HEAD_DIM:2 * C + (h + 1) * HEAD_DIM].reshape(B, T, HEAD_DIM)

        # Rotary: y1 = x1*cos + x2*sin ; y2 = -x1*sin + x2*cos.
        # The rotated halves are only contracted against each other, so keep
        # them split and sum the two partial dot products (no concat / roll).
        q1, q2 = q[..., :HALF], q[..., HALF:]
        k1, k2 = k[..., :HALF], k[..., HALF:]
        rq1 = q1 * cos + q2 * sin
        rq2 = q2 * cos - q1 * sin
        rk1 = k1 * cos + k2 * sin
        rk2 = k2 * cos - k1 * sin

        # sm_scale is already folded into the Q weight columns.
        s = (jnp.einsum("btj,bsj->bts", rq1, rk1, preferred_element_type=jnp.float32)
             + jnp.einsum("btj,bsj->bts", rq2, rk2, preferred_element_type=jnp.float32))
        s = jnp.where(causal, s, NEG_INF)

        m = jnp.max(s, axis=-1, keepdims=True)
        p = jnp.exp(s - m)
        l = jnp.sum(p, axis=-1, keepdims=True)
        y = jnp.einsum("bts,bsd->btd", p, v, preferred_element_type=jnp.float32)
        y = y * pl.reciprocal(l, approx=False)                            # (B, T, HEAD_DIM)
        head_outs.append(y.reshape(B * T, HEAD_DIM))

    y = jnp.concatenate(head_outs, axis=-1)                               # (BT, C), lane-dense
    # attn_scale is folded into wo, so this is a plain residual add.
    x = x + jnp.dot(y, wo_ref[...], preferred_element_type=jnp.float32)

    # ----------------------- MLP branch -----------------------
    xn = _rms(x)
    hdn = jnp.dot(xn, wfc_ref[...], preferred_element_type=jnp.float32)   # (BT, 4C)
    hdn = 0.5 * hdn * (1.0 + erf(hdn * (1.0 / math.sqrt(2.0))))           # exact GELU
    x = x + jnp.dot(hdn, wproj_ref[...], preferred_element_type=jnp.float32)

    o_ref[...] = x.astype(o_ref.dtype)


def prepare_fused_params(params):
    """One-time weight prep: transpose to (in, out), fuse Q/K/V columns, and
    fold the softmax scale (into Wq) and attn residual scale (into Wo)."""
    return {
        "wqkv": jnp.concatenate(
            [params["wq"].T * SM_SCALE, params["wk"].T, params["wv"].T], axis=1),  # (C, 3C)
        "wo_t": params["wo"].T * ATTN_SCALE,                                       # (C, C)
        "wfc_t": params["w_fc"].T,                                                 # (C, 4C)
        "wproj_t": params["w_proj"].T,                                             # (4C, C)
        "cos": params["cos"],                                                      # (T, HALF)
        "sin": params["sin"],
    }


def block_forward(x, fused):
    x2 = x.reshape(B * T, C)
    out = pl.pallas_call(
        _block_kernel,
        out_shape=jax.ShapeDtypeStruct((B * T, C), x.dtype),
    )(x2, fused["wqkv"], fused["wo_t"], fused["wfc_t"], fused["wproj_t"],
      fused["cos"], fused["sin"])
    return out.reshape(B, T, C)


# ---- pure-JAX reference (for correctness check) ------------------------------
def ref_block(x, params):
    def rms(v):
        v32 = v.astype(jnp.float32)
        return (v32 * lax.rsqrt(jnp.mean(v32 * v32, -1, keepdims=True) + EPS)).astype(v.dtype)

    xn = rms(x)
    q = xn @ params["wq"].T
    k = xn @ params["wk"].T
    v = xn @ params["wv"].T
    q = q.reshape(B, T, N_HEAD, HEAD_DIM)
    k = k.reshape(B, T, N_HEAD, HEAD_DIM)
    v = v.reshape(B, T, N_HEAD, HEAD_DIM)
    cos = params["cos"][None, :, None, :]
    sin = params["sin"][None, :, None, :]

    def rope(t):
        t1, t2 = t[..., :HALF], t[..., HALF:]
        return jnp.concatenate([t1 * cos + t2 * sin, -t1 * sin + t2 * cos], axis=-1)

    q, k = rope(q), rope(k)
    q = q.transpose(0, 2, 1, 3)
    k = k.transpose(0, 2, 1, 3)
    v = v.transpose(0, 2, 1, 3)
    s = jnp.einsum("bhqd,bhkd->bhqk", q, k) / math.sqrt(HEAD_DIM)
    mask = jnp.tril(jnp.ones((T, T), dtype=bool))
    s = jnp.where(mask, s, -jnp.inf)
    p = jax.nn.softmax(s, axis=-1)
    y = jnp.einsum("bhqk,bhkd->bhqd", p, v)
    y = y.transpose(0, 2, 1, 3).reshape(B, T, C)
    y = y @ params["wo"].T
    x = x + ATTN_SCALE * y

    xn = rms(x)
    h = xn @ params["w_fc"].T
    h = 0.5 * h * (1.0 + erf(h / math.sqrt(2.0)))
    x = x + h @ params["w_proj"].T
    return x


# ---- main --------------------------------------------------------------------
if __name__ == "__main__":
    key = jax.random.PRNGKey(0)
    ks = jax.random.split(key, 7)

    def init(k, shape):
        return 0.02 * jax.random.normal(k, shape, dtype=jnp.float32)

    params = {
        # stored in PyTorch nn.Linear layout: (out_features, in_features)
        "wq": init(ks[0], (C, C)),
        "wk": init(ks[1], (C, C)),
        "wv": init(ks[2], (C, C)),
        "wo": init(ks[3], (C, C)),
        "w_fc": init(ks[4], (4 * C, C)),
        "w_proj": init(ks[5], (C, 4 * C)),
    }

    # rotary cos/sin cache (matches Rotary.forward): freqs = outer(t, inv_freq)
    inv_freq = 1.0 / (10000.0 ** (jnp.arange(0, HEAD_DIM, 2, dtype=jnp.float32) / HEAD_DIM))
    t = jnp.arange(T, dtype=jnp.float32)
    freqs = jnp.outer(t, inv_freq)               # (T, HEAD_DIM // 2)
    params["cos"] = jnp.cos(freqs)
    params["sin"] = jnp.sin(freqs)

    # one-time weight fusion / transposition / scale-folding (hoisted out of
    # the forward pass)
    fused = prepare_fused_params(params)

    x = jax.random.normal(ks[6], (B, T, C), dtype=jnp.float32)

    fwd = jax.jit(block_forward)
    out = jax.block_until_ready(fwd(x, fused))
    ref = jax.block_until_ready(ref_block(x, params))

    assert out.shape == (B, T, C) and out.dtype == jnp.float32
    assert jnp.allclose(out, ref, atol=2e-5, rtol=2e-5), (
        f"mismatch: max abs err = {jnp.max(jnp.abs(out - ref))}"
    )
    print("KERNEL_OK")
</pallas_src>

<mosaic_0001>
module attributes {stable_mosaic.version = 11 : i64} {
  func.func @_block_kernel(%arg0: memref<16x32xf32, #tpu.memory_space<vmem>>, %arg1: memref<32x96xf32, #tpu.memory_space<vmem>>, %arg2: memref<32x32xf32, #tpu.memory_space<vmem>>, %arg3: memref<32x128xf32, #tpu.memory_space<vmem>>, %arg4: memref<128x32xf32, #tpu.memory_space<vmem>>, %arg5: memref<8x4xf32, #tpu.memory_space<vmem>>, %arg6: memref<8x4xf32, #tpu.memory_space<vmem>>, %arg7: memref<16x32xf32, #tpu.memory_space<vmem>>) attributes {dimension_semantics = [], scalar_prefetch = 0 : i64, scratch_operands = 0 : i64, tpu.core_type = #tpu.core_type<tc>} {
    %c0 = arith.constant 0 : index
    %c0_0 = arith.constant 0 : index
    %0 = vector.load %arg0[%c0, %c0_0] : memref<16x32xf32, #tpu.memory_space<vmem>>, vector<16x32xf32>
    %1 = arith.mulf %0, %0 : vector<16x32xf32>
    %cst = arith.constant dense<0.000000e+00> : vector<16xf32>
    %2 = vector.multi_reduction <add>, %1, %cst [1] : vector<16x32xf32> to vector<16xf32>
    %3 = vector.shape_cast %2 : vector<16xf32> to vector<16x1xf32>
    %cst_1 = arith.constant 3.200000e+01 : f32
    %4 = vector.broadcast %cst_1 : f32 to vector<16x1xf32>
    %5 = arith.divf %3, %4 : vector<16x1xf32>
    %cst_2 = arith.constant 9.99999997E-7 : f32
    %6 = vector.broadcast %cst_2 : f32 to vector<16x1xf32>
    %7 = arith.addf %5, %6 : vector<16x1xf32>
    %8 = math.rsqrt %7 : vector<16x1xf32>
    %9 = vector.broadcast %8 : vector<16x1xf32> to vector<16x32xf32>
    %10 = arith.mulf %0, %9 : vector<16x32xf32>
    %c0_3 = arith.constant 0 : index
    %c0_4 = arith.constant 0 : index
    %11 = vector.load %arg1[%c0_3, %c0_4] : memref<32x96xf32, #tpu.memory_space<vmem>>, vector<32x96xf32>
    %cst_5 = arith.constant dense<0.000000e+00> : vector<16x96xf32>
    %12 = tpu.matmul %10, %11, %cst_5 {dimension_numbers = #tpu.dot_dimension_numbers<[1], [0], [0], [1], [0, 0, 1, 1], [], []>} : vector<16x32xf32>, vector<32x96xf32>, vector<16x96xf32> -> vector<16x96xf32>
    %c0_6 = arith.constant 0 : index
    %c0_7 = arith.constant 0 : index
    %13 = vector.load %arg5[%c0_6, %c0_7] : memref<8x4xf32, #tpu.memory_space<vmem>>, vector<8x4xf32>
    %14 = vector.shape_cast %13 : vector<8x4xf32> to vector<1x8x4xf32>
    %c0_8 = arith.constant 0 : index
    %c0_9 = arith.constant 0 : index
    %15 = vector.load %arg6[%c0_8, %c0_9] : memref<8x4xf32, #tpu.memory_space<vmem>>, vector<8x4xf32>
    %16 = vector.shape_cast %15 : vector<8x4xf32> to vector<1x8x4xf32>
    %17 = tpu.iota {dimensions = array<i32: 0>} : vector<8x8xi32>
    %18 = tpu.iota {dimensions = array<i32: 1>} : vector<8x8xi32>
    %19 = arith.cmpi sle, %18, %17 : vector<8x8xi32>
    %20 = vector.shape_cast %19 : vector<8x8xi1> to vector<1x8x8xi1>
    %21 = vector.extract_strided_slice %12 {offsets = [0, 0], sizes = [16, 8], strides = [1, 1]} : vector<16x96xf32> to vector<16x8xf32>
    %22 = vector.shape_cast %21 : vector<16x8xf32> to vector<2x8x8xf32>
    %23 = vector.extract_strided_slice %12 {offsets = [0, 32], sizes = [16, 8], strides = [1, 1]} : vector<16x96xf32> to vector<16x8xf32>
    %24 = vector.shape_cast %23 : vector<16x8xf32> to vector<2x8x8xf32>
    %25 = vector.extract_strided_slice %12 {offsets = [0, 64], sizes = [16, 8], strides = [1, 1]} : vector<16x96xf32> to vector<16x8xf32>
    %26 = vector.shape_cast %25 : vector<16x8xf32> to vector<2x8x8xf32>
    %27 = vector.extract_strided_slice %22 {offsets = [0, 0, 0], sizes = [2, 8, 4], strides = [1, 1, 1]} : vector<2x8x8xf32> to vector<2x8x4xf32>
    %28 = vector.extract_strided_slice %22 {offsets = [0, 0, 4], sizes = [2, 8, 4], strides = [1, 1, 1]} : vector<2x8x8xf32> to vector<2x8x4xf32>
    %29 = vector.extract_strided_slice %24 {offsets = [0, 0, 0], sizes = [2, 8, 4], strides = [1, 1, 1]} : vector<2x8x8xf32> to vector<2x8x4xf32>
    %30 = vector.extract_strided_slice %24 {offsets = [0, 0, 4], sizes = [2, 8, 4], strides = [1, 1, 1]} : vector<2x8x8xf32> to vector<2x8x4xf32>
    %31 = vector.broadcast %14 : vector<1x8x4xf32> to vector<2x8x4xf32>
    %32 = arith.mulf %27, %31 : vector<2x8x4xf32>
    %33 = vector.broadcast %16 : vector<1x8x4xf32> to vector<2x8x4xf32>
    %34 = arith.mulf %28, %33 : vector<2x8x4xf32>
    %35 = arith.addf %32, %34 : vector<2x8x4xf32>
    %36 = vector.broadcast %14 : vector<1x8x4xf32> to vector<2x8x4xf32>
    %37 = arith.mulf %28, %36 : vector<2x8x4xf32>
    %38 = vector.broadcast %16 : vector<1x8x4xf32> to vector<2x8x4xf32>
    %39 = arith.mulf %27, %38 : vector<2x8x4xf32>
    %40 = arith.subf %37, %39 : vector<2x8x4xf32>
    %41 = vector.broadcast %14 : vector<1x8x4xf32> to vector<2x8x4xf32>
    %42 = arith.mulf %29, %41 : vector<2x8x4xf32>
    %43 = vector.broadcast %16 : vector<1x8x4xf32> to vector<2x8x4xf32>
    %44 = arith.mulf %30, %43 : vector<2x8x4xf32>
    %45 = arith.addf %42, %44 : vector<2x8x4xf32>
    %46 = vector.broadcast %14 : vector<1x8x4xf32> to vector<2x8x4xf32>
    %47 = arith.mulf %30, %46 : vector<2x8x4xf32>
    %48 = vector.broadcast %16 : vector<1x8x4xf32> to vector<2x8x4xf32>
    %49 = arith.mulf %29, %48 : vector<2x8x4xf32>
    %50 = arith.subf %47, %49 : vector<2x8x4xf32>
    "tpu.trace_start"() <{level = 10 : i32, message = "btj,bsj->bts"}> : () -> ()
    %cst_10 = arith.constant dense<0.000000e+00> : vector<2x8x8xf32>
    %51 = tpu.matmul %35, %45, %cst_10 {dimension_numbers = #tpu.dot_dimension_numbers<[2], [2], [1], [1], [0, 0, 0, 1, 1, 1], [0], [0]>} : vector<2x8x4xf32>, vector<2x8x4xf32>, vector<2x8x8xf32> -> vector<2x8x8xf32>
    %cst_11 = arith.constant dense<0.000000e+00> : vector<2x8x8xf32>
    %52 = tpu.matmul %40, %50, %cst_11 {dimension_numbers = #tpu.dot_dimension_numbers<[2], [2], [1], [1], [0, 0, 0, 1, 1, 1], [0], [0]>} : vector<2x8x4xf32>, vector<2x8x4xf32>, vector<2x8x8xf32> -> vector<2x8x8xf32>
    "tpu.trace_stop"() : () -> ()
    %53 = arith.addf %51, %52 : vector<2x8x8xf32>
    %cst_12 = arith.constant -1.000000e+30 : f32
    %54 = vector.shape_cast %20 : vector<1x8x8xi1> to vector<1x8x8xi1>
    %55 = vector.broadcast %54 : vector<1x8x8xi1> to vector<2x8x8xi1>
    %56 = vector.broadcast %cst_12 : f32 to vector<2x8x8xf32>
    %57 = arith.select %55, %53, %56 : vector<2x8x8xi1>, vector<2x8x8xf32>
    %cst_13 = arith.constant dense<0xFF800000> : vector<2x8xf32>
    %58 = vector.multi_reduction <maximumf>, %57, %cst_13 [2] : vector<2x8x8xf32> to vector<2x8xf32>
    %59 = vector.shape_cast %58 : vector<2x8xf32> to vector<2x8x1xf32>
    %60 = vector.broadcast %59 : vector<2x8x1xf32> to vector<2x8x8xf32>
    %61 = arith.subf %57, %60 : vector<2x8x8xf32>
    %62 = math.exp %61 : vector<2x8x8xf32>
    %cst_14 = arith.constant dense<0.000000e+00> : vector<2x8xf32>
    %63 = vector.multi_reduction <add>, %62, %cst_14 [2] : vector<2x8x8xf32> to vector<2x8xf32>
    %64 = vector.shape_cast %63 : vector<2x8xf32> to vector<2x8x1xf32>
    "tpu.trace_start"() <{level = 10 : i32, message = "bts,bsd->btd"}> : () -> ()
    %cst_15 = arith.constant dense<0.000000e+00> : vector<2x8x8xf32>
    %65 = tpu.matmul %62, %26, %cst_15 {dimension_numbers = #tpu.dot_dimension_numbers<[2], [1], [1], [2], [0, 0, 0, 1, 1, 2], [0], [0]>} : vector<2x8x8xf32>, vector<2x8x8xf32>, vector<2x8x8xf32> -> vector<2x8x8xf32>
    "tpu.trace_stop"() : () -> ()
    %66 = tpu.reciprocal %64 : vector<2x8x1xf32> -> vector<2x8x1xf32>
    %67 = vector.broadcast %66 : vector<2x8x1xf32> to vector<2x8x8xf32>
    %68 = arith.mulf %65, %67 : vector<2x8x8xf32>
    %69 = vector.shape_cast %68 : vector<2x8x8xf32> to vector<16x8xf32>
    %70 = vector.extract_strided_slice %12 {offsets = [0, 8], sizes = [16, 8], strides = [1, 1]} : vector<16x96xf32> to vector<16x8xf32>
    %71 = vector.shape_cast %70 : vector<16x8xf32> to vector<2x8x8xf32>
    %72 = vector.extract_strided_slice %12 {offsets = [0, 40], sizes = [16, 8], strides = [1, 1]} : vector<16x96xf32> to vector<16x8xf32>
    %73 = vector.shape_cast %72 : vector<16x8xf32> to vector<2x8x8xf32>
    %74 = vector.extract_strided_slice %12 {offsets = [0, 72], sizes = [16, 8], strides = [1, 1]} : vector<16x96xf32> to vector<16x8xf32>
    %75 = vector.shape_cast %74 : vector<16x8xf32> to vector<2x8x8xf32>
    %76 = vector.extract_strided_slice %71 {offsets = [0, 0, 0], sizes = [2, 8, 4], strides = [1, 1, 1]} : vector<2x8x8xf32> to vector<2x8x4xf32>
    %77 = vector.extract_strided_slice %71 {offsets = [0, 0, 4], sizes = [2, 8, 4], strides = [1, 1, 1]} : vector<2x8x8xf32> to vector<2x8x4xf32>
    %78 = vector.extract_strided_slice %73 {offsets = [0, 0, 0], sizes = [2, 8, 4], strides = [1, 1, 1]} : vector<2x8x8xf32> to vector<2x8x4xf32>
    %79 = vector.extract_strided_slice %73 {offsets = [0, 0, 4], sizes = [2, 8, 4], strides = [1, 1, 1]} : vector<2x8x8xf32> to vector<2x8x4xf32>
    %80 = vector.broadcast %14 : vector<1x8x4xf32> to vector<2x8x4xf32>
    %81 = arith.mulf %76, %80 : vector<2x8x4xf32>
    %82 = vector.broadcast %16 : vector<1x8x4xf32> to vector<2x8x4xf32>
    %83 = arith.mulf %77, %82 : vector<2x8x4xf32>
    %84 = arith.addf %81, %83 : vector<2x8x4xf32>
    %85 = vector.broadcast %14 : vector<1x8x4xf32> to vector<2x8x4xf32>
    %86 = arith.mulf %77, %85 : vector<2x8x4xf32>
    %87 = vector.broadcast %16 : vector<1x8x4xf32> to vector<2x8x4xf32>
    %88 = arith.mulf %76, %87 : vector<2x8x4xf32>
    %89 = arith.subf %86, %88 : vector<2x8x4xf32>
    %90 = vector.broadcast %14 : vector<1x8x4xf32> to vector<2x8x4xf32>
    %91 = arith.mulf %78, %90 : vector<2x8x4xf32>
    %92 = vector.broadcast %16 : vector<1x8x4xf32> to vector<2x8x4xf32>
    %93 = arith.mulf %79, %92 : vector<2x8x4xf32>
    %94 = arith.addf %91, %93 : vector<2x8x4xf32>
    %95 = vector.broadcast %14 : vector<1x8x4xf32> to vector<2x8x4xf32>
    %96 = arith.mulf %79, %95 : vector<2x8x4xf32>
    %97 = vector.broadcast %16 : vector<1x8x4xf32> to vector<2x8x4xf32>
    %98 = arith.mulf %78, %97 : vector<2x8x4xf32>
    %99 = arith.subf %96, %98 : vector<2x8x4xf32>
    "tpu.trace_start"() <{level = 10 : i32, message = "btj,bsj->bts"}> : () -> ()
    %cst_16 = arith.constant dense<0.000000e+00> : vector<2x8x8xf32>
    %100 = tpu.matmul %84, %94, %cst_16 {dimension_numbers = #tpu.dot_dimension_numbers<[2], [2], [1], [1], [0, 0, 0, 1, 1, 1], [0], [0]>} : vector<2x8x4xf32>, vector<2x8x4xf32>, vector<2x8x8xf32> -> vector<2x8x8xf32>
    %cst_17 = arith.constant dense<0.000000e+00> : vector<2x8x8xf32>
    %101 = tpu.matmul %89, %99, %cst_17 {dimension_numbers = #tpu.dot_dimension_numbers<[2], [2], [1], [1], [0, 0, 0, 1, 1, 1], [0], [0]>} : vector<2x8x4xf32>, vector<2x8x4xf32>, vector<2x8x8xf32> -> vector<2x8x8xf32>
    "tpu.trace_stop"() : () -> ()
    %102 = arith.addf %100, %101 : vector<2x8x8xf32>
    %cst_18 = arith.constant -1.000000e+30 : f32
    %103 = vector.shape_cast %20 : vector<1x8x8xi1> to vector<1x8x8xi1>
    %104 = vector.broadcast %103 : vector<1x8x8xi1> to vector<2x8x8xi1>
    %105 = vector.broadcast %cst_18 : f32 to vector<2x8x8xf32>
    %106 = arith.select %104, %102, %105 : vector<2x8x8xi1>, vector<2x8x8xf32>
    %cst_19 = arith.constant dense<0xFF800000> : vector<2x8xf32>
    %107 = vector.multi_reduction <maximumf>, %106, %cst_19 [2] : vector<2x8x8xf32> to vector<2x8xf32>
    %108 = vector.shape_cast %107 : vector<2x8xf32> to vector<2x8x1xf32>
    %109 = vector.broadcast %108 : vector<2x8x1xf32> to vector<2x8x8xf32>
    %110 = arith.subf %106, %109 : vector<2x8x8xf32>
    %111 = math.exp %110 : vector<2x8x8xf32>
    %cst_20 = arith.constant dense<0.000000e+00> : vector<2x8xf32>
    %112 = vector.multi_reduction <add>, %111, %cst_20 [2] : vector<2x8x8xf32> to vector<2x8xf32>
    %113 = vector.shape_cast %112 : vector<2x8xf32> to vector<2x8x1xf32>
    "tpu.trace_start"() <{level = 10 : i32, message = "bts,bsd->btd"}> : () -> ()
    %cst_21 = arith.constant dense<0.000000e+00> : vector<2x8x8xf32>
    %114 = tpu.matmul %111, %75, %cst_21 {dimension_numbers = #tpu.dot_dimension_numbers<[2], [1], [1], [2], [0, 0, 0, 1, 1, 2], [0], [0]>} : vector<2x8x8xf32>, vector<2x8x8xf32>, vector<2x8x8xf32> -> vector<2x8x8xf32>
    "tpu.trace_stop"() : () -> ()
    %115 = tpu.reciprocal %113 : vector<2x8x1xf32> -> vector<2x8x1xf32>
    %116 = vector.broadcast %115 : vector<2x8x1xf32> to vector<2x8x8xf32>
    %117 = arith.mulf %114, %116 : vector<2x8x8xf32>
    %118 = vector.shape_cast %117 : vector<2x8x8xf32> to vector<16x8xf32>
    %119 = vector.extract_strided_slice %12 {offsets = [0, 16], sizes = [16, 8], strides = [1, 1]} : vector<16x96xf32> to vector<16x8xf32>
    %120 = vector.shape_cast %119 : vector<16x8xf32> to vector<2x8x8xf32>
    %121 = vector.extract_strided_slice %12 {offsets = [0, 48], sizes = [16, 8], strides = [1, 1]} : vector<16x96xf32> to vector<16x8xf32>
    %122 = vector.shape_cast %121 : vector<16x8xf32> to vector<2x8x8xf32>
    %123 = vector.extract_strided_slice %12 {offsets = [0, 80], sizes = [16, 8], strides = [1, 1]} : vector<16x96xf32> to vector<16x8xf32>
    %124 = vector.shape_cast %123 : vector<16x8xf32> to vector<2x8x8xf32>
    %125 = vector.extract_strided_slice %120 {offsets = [0, 0, 0], sizes = [2, 8, 4], strides = [1, 1, 1]} : vector<2x8x8xf32> to vector<2x8x4xf32>
    %126 = vector.extract_strided_slice %120 {offsets = [0, 0, 4], sizes = [2, 8, 4], strides = [1, 1, 1]} : vector<2x8x8xf32> to vector<2x8x4xf32>
    %127 = vector.extract_strided_slice %122 {offsets = [0, 0, 0], sizes = [2, 8, 4], strides = [1, 1, 1]} : vector<2x8x8xf32> to vector<2x8x4xf32>
    %128 = vector.extract_strided_slice %122 {offsets = [0, 0, 4], sizes = [2, 8, 4], strides = [1, 1, 1]} : vector<2x8x8xf32> to vector<2x8x4xf32>
    %129 = vector.broadcast %14 : vector<1x8x4xf32> to vector<2x8x4xf32>
    %130 = arith.mulf %125, %129 : vector<2x8x4xf32>
    %131 = vector.broadcast %16 : vector<1x8x4xf32> to vector<2x8x4xf32>
    %132 = arith.mulf %126, %131 : vector<2x8x4xf32>
    %133 = arith.addf %130, %132 : vector<2x8x4xf32>
    %134 = vector.broadcast %14 : vector<1x8x4xf32> to vector<2x8x4xf32>
    %135 = arith.mulf %126, %134 : vector<2x8x4xf32>
    %136 = vector.broadcast %16 : vector<1x8x4xf32> to vector<2x8x4xf32>
    %137 = arith.mulf %125, %136 : vector<2x8x4xf32>
    %138 = arith.subf %135, %137 : vector<2x8x4xf32>
    %139 = vector.broadcast %14 : vector<1x8x4xf32> to vector<2x8x4xf32>
    %140 = arith.mulf %127, %139 : vector<2x8x4xf32>
    %141 = vector.broadcast %16 : vector<1x8x4xf32> to vector<2x8x4xf32>
    %142 = arith.mulf %128, %141 : vector<2x8x4xf32>
    %143 = arith.addf %140, %142 : vector<2x8x4xf32>
    %144 = vector.broadcast %14 : vector<1x8x4xf32> to vector<2x8x4xf32>
    %145 = arith.mulf %128, %144 : vector<2x8x4xf32>
    %146 = vector.broadcast %16 : vector<1x8x4xf32> to vector<2x8x4xf32>
    %147 = arith.mulf %127, %146 : vector<2x8x4xf32>
    %148 = arith.subf %145, %147 : vector<2x8x4xf32>
    "tpu.trace_start"() <{level = 10 : i32, message = "btj,bsj->bts"}> : () -> ()
    %cst_22 = arith.constant dense<0.000000e+00> : vector<2x8x8xf32>
    %149 = tpu.matmul %133, %143, %cst_22 {dimension_numbers = #tpu.dot_dimension_numbers<[2], [2], [1], [1], [0, 0, 0, 1, 1, 1], [0], [0]>} : vector<2x8x4xf32>, vector<2x8x4xf32>, vector<2x8x8xf32> -> vector<2x8x8xf32>
    %cst_23 = arith.constant dense<0.000000e+00> : vector<2x8x8xf32>
    %150 = tpu.matmul %138, %148, %cst_23 {dimension_numbers = #tpu.dot_dimension_numbers<[2], [2], [1], [1], [0, 0, 0, 1, 1, 1], [0], [0]>} : vector<2x8x4xf32>, vector<2x8x4xf32>, vector<2x8x8xf32> -> vector<2x8x8xf32>
    "tpu.trace_stop"() : () -> ()
    %151 = arith.addf %149, %150 : vector<2x8x8xf32>
    %cst_24 = arith.constant -1.000000e+30 : f32
    %152 = vector.shape_cast %20 : vector<1x8x8xi1> to vector<1x8x8xi1>
    %153 = vector.broadcast %152 : vector<1x8x8xi1> to vector<2x8x8xi1>
    %154 = vector.broadcast %cst_24 : f32 to vector<2x8x8xf32>
    %155 = arith.select %153, %151, %154 : vector<2x8x8xi1>, vector<2x8x8xf32>
    %cst_25 = arith.constant dense<0xFF800000> : vector<2x8xf32>
    %156 = vector.multi_reduction <maximumf>, %155, %cst_25 [2] : vector<2x8x8xf32> to vector<2x8xf32>
    %157 = vector.shape_cast %156 : vector<2x8xf32> to vector<2x8x1xf32>
    %158 = vector.broadcast %157 : vector<2x8x1xf32> to vector<2x8x8xf32>
    %159 = arith.subf %155, %158 : vector<2x8x8xf32>
    %160 = math.exp %159 : vector<2x8x8xf32>
    %cst_26 = arith.constant dense<0.000000e+00> : vector<2x8xf32>
    %161 = vector.multi_reduction <add>, %160, %cst_26 [2] : vector<2x8x8xf32> to vector<2x8xf32>
    %162 = vector.shape_cast %161 : vector<2x8xf32> to vector<2x8x1xf32>
    "tpu.trace_start"() <{level = 10 : i32, message = "bts,bsd->btd"}> : () -> ()
    %cst_27 = arith.constant dense<0.000000e+00> : vector<2x8x8xf32>
    %163 = tpu.matmul %160, %124, %cst_27 {dimension_numbers = #tpu.dot_dimension_numbers<[2], [1], [1], [2], [0, 0, 0, 1, 1, 2], [0], [0]>} : vector<2x8x8xf32>, vector<2x8x8xf32>, vector<2x8x8xf32> -> vector<2x8x8xf32>
    "tpu.trace_stop"() : () -> ()
    %164 = tpu.reciprocal %162 : vector<2x8x1xf32> -> vector<2x8x1xf32>
    %165 = vector.broadcast %164 : vector<2x8x1xf32> to vector<2x8x8xf32>
    %166 = arith.mulf %163, %165 : vector<2x8x8xf32>
    %167 = vector.shape_cast %166 : vector<2x8x8xf32> to vector<16x8xf32>
    %168 = vector.extract_strided_slice %12 {offsets = [0, 24], sizes = [16, 8], strides = [1, 1]} : vector<16x96xf32> to vector<16x8xf32>
    %169 = vector.shape_cast %168 : vector<16x8xf32> to vector<2x8x8xf32>
    %170 = vector.extract_strided_slice %12 {offsets = [0, 56], sizes = [16, 8], strides = [1, 1]} : vector<16x96xf32> to vector<16x8xf32>
    %171 = vector.shape_cast %170 : vector<16x8xf32> to vector<2x8x8xf32>
    %172 = vector.extract_strided_slice %12 {offsets = [0, 88], sizes = [16, 8], strides = [1, 1]} : vector<16x96xf32> to vector<16x8xf32>
    %173 = vector.shape_cast %172 : vector<16x8xf32> to vector<2x8x8xf32>
    %174 = vector.extract_strided_slice %169 {offsets = [0, 0, 0], sizes = [2, 8, 4], strides = [1, 1, 1]} : vector<2x8x8xf32> to vector<2x8x4xf32>
    %175 = vector.extract_strided_slice %169 {offsets = [0, 0, 4], sizes = [2, 8, 4], strides = [1, 1, 1]} : vector<2x8x8xf32> to vector<2x8x4xf32>
    %176 = vector.extract_strided_slice %171 {offsets = [0, 0, 0], sizes = [2, 8, 4], strides = [1, 1, 1]} : vector<2x8x8xf32> to vector<2x8x4xf32>
    %177 = vector.extract_strided_slice %171 {offsets = [0, 0, 4], sizes = [2, 8, 4], strides = [1, 1, 1]} : vector<2x8x8xf32> to vector<2x8x4xf32>
    %178 = vector.broadcast %14 : vector<1x8x4xf32> to vector<2x8x4xf32>
    %179 = arith.mulf %174, %178 : vector<2x8x4xf32>
    %180 = vector.broadcast %16 : vector<1x8x4xf32> to vector<2x8x4xf32>
    %181 = arith.mulf %175, %180 : vector<2x8x4xf32>
    %182 = arith.addf %179, %181 : vector<2x8x4xf32>
    %183 = vector.broadcast %14 : vector<1x8x4xf32> to vector<2x8x4xf32>
    %184 = arith.mulf %175, %183 : vector<2x8x4xf32>
    %185 = vector.broadcast %16 : vector<1x8x4xf32> to vector<2x8x4xf32>
    %186 = arith.mulf %174, %185 : vector<2x8x4xf32>
    %187 = arith.subf %184, %186 : vector<2x8x4xf32>
    %188 = vector.broadcast %14 : vector<1x8x4xf32> to vector<2x8x4xf32>
    %189 = arith.mulf %176, %188 : vector<2x8x4xf32>
    %190 = vector.broadcast %16 : vector<1x8x4xf32> to vector<2x8x4xf32>
    %191 = arith.mulf %177, %190 : vector<2x8x4xf32>
    %192 = arith.addf %189, %191 : vector<2x8x4xf32>
    %193 = vector.broadcast %14 : vector<1x8x4xf32> to vector<2x8x4xf32>
    %194 = arith.mulf %177, %193 : vector<2x8x4xf32>
    %195 = vector.broadcast %16 : vector<1x8x4xf32> to vector<2x8x4xf32>
    %196 = arith.mulf %176, %195 : vector<2x8x4xf32>
    %197 = arith.subf %194, %196 : vector<2x8x4xf32>
    "tpu.trace_start"() <{level = 10 : i32, message = "btj,bsj->bts"}> : () -> ()
    %cst_28 = arith.constant dense<0.000000e+00> : vector<2x8x8xf32>
    %198 = tpu.matmul %182, %192, %cst_28 {dimension_numbers = #tpu.dot_dimension_numbers<[2], [2], [1], [1], [0, 0, 0, 1, 1, 1], [0], [0]>} : vector<2x8x4xf32>, vector<2x8x4xf32>, vector<2x8x8xf32> -> vector<2x8x8xf32>
    %cst_29 = arith.constant dense<0.000000e+00> : vector<2x8x8xf32>
    %199 = tpu.matmul %187, %197, %cst_29 {dimension_numbers = #tpu.dot_dimension_numbers<[2], [2], [1], [1], [0, 0, 0, 1, 1, 1], [0], [0]>} : vector<2x8x4xf32>, vector<2x8x4xf32>, vector<2x8x8xf32> -> vector<2x8x8xf32>
    "tpu.trace_stop"() : () -> ()
    %200 = arith.addf %198, %199 : vector<2x8x8xf32>
    %cst_30 = arith.constant -1.000000e+30 : f32
    %201 = vector.shape_cast %20 : vector<1x8x8xi1> to vector<1x8x8xi1>
    %202 = vector.broadcast %201 : vector<1x8x8xi1> to vector<2x8x8xi1>
    %203 = vector.broadcast %cst_30 : f32 to vector<2x8x8xf32>
    %204 = arith.select %202, %200, %203 : vector<2x8x8xi1>, vector<2x8x8xf32>
    %cst_31 = arith.constant dense<0xFF800000> : vector<2x8xf32>
    %205 = vector.multi_reduction <maximumf>, %204, %cst_31 [2] : vector<2x8x8xf32> to vector<2x8xf32>
    %206 = vector.shape_cast %205 : vector<2x8xf32> to vector<2x8x1xf32>
    %207 = vector.broadcast %206 : vector<2x8x1xf32> to vector<2x8x8xf32>
    %208 = arith.subf %204, %207 : vector<2x8x8xf32>
    %209 = math.exp %208 : vector<2x8x8xf32>
    %cst_32 = arith.constant dense<0.000000e+00> : vector<2x8xf32>
    %210 = vector.multi_reduction <add>, %209, %cst_32 [2] : vector<2x8x8xf32> to vector<2x8xf32>
    %211 = vector.shape_cast %210 : vector<2x8xf32> to vector<2x8x1xf32>
    "tpu.trace_start"() <{level = 10 : i32, message = "bts,bsd->btd"}> : () -> ()
    %cst_33 = arith.constant dense<0.000000e+00> : vector<2x8x8xf32>
    %212 = tpu.matmul %209, %173, %cst_33 {dimension_numbers = #tpu.dot_dimension_numbers<[2], [1], [1], [2], [0, 0, 0, 1, 1, 2], [0], [0]>} : vector<2x8x8xf32>, vector<2x8x8xf32>, vector<2x8x8xf32> -> vector<2x8x8xf32>
    "tpu.trace_stop"() : () -> ()
    %213 = tpu.reciprocal %211 : vector<2x8x1xf32> -> vector<2x8x1xf32>
    %214 = vector.broadcast %213 : vector<2x8x1xf32> to vector<2x8x8xf32>
    %215 = arith.mulf %212, %214 : vector<2x8x8xf32>
    %216 = vector.shape_cast %215 : vector<2x8x8xf32> to vector<16x8xf32>
    %217 = tpu.concatenate %69, %118, %167, %216 in 1 : vector<16x8xf32>, vector<16x8xf32>, vector<16x8xf32>, vector<16x8xf32> -> vector<16x32xf32>
    %c0_34 = arith.constant 0 : index
    %c0_35 = arith.constant 0 : index
    %218 = vector.load %arg2[%c0_34, %c0_35] : memref<32x32xf32, #tpu.memory_space<vmem>>, vector<32x32xf32>
    %cst_36 = arith.constant dense<0.000000e+00> : vector<16x32xf32>
    %219 = tpu.matmul %217, %218, %cst_36 {dimension_numbers = #tpu.dot_dimension_numbers<[1], [0], [0], [1], [0, 0, 1, 1], [], []>} : vector<16x32xf32>, vector<32x32xf32>, vector<16x32xf32> -> vector<16x32xf32>
    %220 = arith.addf %0, %219 : vector<16x32xf32>
    %221 = arith.mulf %220, %220 : vector<16x32xf32>
    %cst_37 = arith.constant dense<0.000000e+00> : vector<16xf32>
    %222 = vector.multi_reduction <add>, %221, %cst_37 [1] : vector<16x32xf32> to vector<16xf32>
    %223 = vector.shape_cast %222 : vector<16xf32> to vector<16x1xf32>
    %cst_38 = arith.constant 3.200000e+01 : f32
    %224 = vector.broadcast %cst_38 : f32 to vector<16x1xf32>
    %225 = arith.divf %223, %224 : vector<16x1xf32>
    %cst_39 = arith.constant 9.99999997E-7 : f32
    %226 = vector.broadcast %cst_39 : f32 to vector<16x1xf32>
    %227 = arith.addf %225, %226 : vector<16x1xf32>
    %228 = math.rsqrt %227 : vector<16x1xf32>
    %229 = vector.broadcast %228 : vector<16x1xf32> to vector<16x32xf32>
    %230 = arith.mulf %220, %229 : vector<16x32xf32>
    %c0_40 = arith.constant 0 : index
    %c0_41 = arith.constant 0 : index
    %231 = vector.load %arg3[%c0_40, %c0_41] : memref<32x128xf32, #tpu.memory_space<vmem>>, vector<32x128xf32>
    %cst_42 = arith.constant dense<0.000000e+00> : vector<16x128xf32>
    %232 = tpu.matmul %230, %231, %cst_42 {dimension_numbers = #tpu.dot_dimension_numbers<[1], [0], [0], [1], [0, 0, 1, 1], [], []>} : vector<16x32xf32>, vector<32x128xf32>, vector<16x128xf32> -> vector<16x128xf32>
    %cst_43 = arith.constant 5.000000e-01 : f32
    %233 = vector.broadcast %cst_43 : f32 to vector<16x128xf32>
    %234 = arith.mulf %233, %232 : vector<16x128xf32>
    %cst_44 = arith.constant 0.707106769 : f32
    %235 = vector.broadcast %cst_44 : f32 to vector<16x128xf32>
    %236 = arith.mulf %232, %235 : vector<16x128xf32>
    %237 = math.erf %236 : vector<16x128xf32>
    %cst_45 = arith.constant 1.000000e+00 : f32
    %238 = vector.broadcast %cst_45 : f32 to vector<16x128xf32>
    %239 = arith.addf %238, %237 : vector<16x128xf32>
    %240 = arith.mulf %234, %239 : vector<16x128xf32>
    %c0_46 = arith.constant 0 : index
    %c0_47 = arith.constant 0 : index
    %241 = vector.load %arg4[%c0_46, %c0_47] : memref<128x32xf32, #tpu.memory_space<vmem>>, vector<128x32xf32>
    %cst_48 = arith.constant dense<0.000000e+00> : vector<16x32xf32>
    %242 = tpu.matmul %240, %241, %cst_48 {dimension_numbers = #tpu.dot_dimension_numbers<[1], [0], [0], [1], [0, 0, 1, 1], [], []>} : vector<16x128xf32>, vector<128x32xf32>, vector<16x32xf32> -> vector<16x32xf32>
    %243 = arith.addf %220, %242 : vector<16x32xf32>
    %c0_49 = arith.constant 0 : index
    %c0_50 = arith.constant 0 : index
    %244 = vector.load %arg7[%c0_49, %c0_50] : memref<16x32xf32, #tpu.memory_space<vmem>>, vector<16x32xf32>
    tpu.vector_store %arg7[%c0_49, %c0_50], %243 {strides = array<i32>} : memref<16x32xf32, #tpu.memory_space<vmem>>, vector<16x32xf32>,
    return
  }
}

</mosaic_0001>

<llo_original>
// kernel: block_forward.1
$region0: #{block_forward.1}
  #allocation0 [shape = 'u32[]', space=smem, size = 0x4, offset = 0x4, fixed_abs, tag = 'smem constant byte address 0x4 - core index']
  #allocation1 [shape = 'u32[144,128]{1,0:T(1,128)}', space=vmem, size = 0x12000, scoped, tag = 'internal scratch']
  %s0 = inlined_call_operand.vmem [shape: f32[16,32], index: 0, kind: input, shape index: {}]
  %s1 = inlined_call_operand.vmem [shape: f32[32,96], index: 1, kind: input, shape index: {}]
  %s2 = inlined_call_operand.vmem [shape: f32[32,32], index: 2, kind: input, shape index: {}]
  %s3 = inlined_call_operand.vmem [shape: f32[32,128], index: 3, kind: input, shape index: {}]
  %s4 = inlined_call_operand.vmem [shape: f32[128,32], index: 4, kind: input, shape index: {}]
  %s5 = inlined_call_operand.vmem [shape: f32[8,4], index: 5, kind: input, shape index: {}]
  %s6 = inlined_call_operand.vmem [shape: f32[8,4], index: 6, kind: input, shape index: {}]
  %s7 = inlined_call_operand.hbm [shape: f32[16,32], index: 7, kind: output, shape index: {}]
  %s8 = sld [smem:[#allocation0]]
  $region38: #{block_forward.1} parent=0
    _
  %s10 = ssub.s32 1, %s8
  %s11 = scalar_select 0, %s10, %s8
  $region1: #{block_forward.1} parent=0
    #allocation2 [shape = 'u8[8192]{0}', space=vmem, size = 0x2000, scoped, tag = 'output window, operand 0, single buffered']
    #allocation3 [shape = 's32[1]{0}', space=sflag, size = 0x4, scoped, tag = 'scoped memory for block_forward.1']
    %12 = vsyncpa [#allocation3], 0
    // Predicated region
    $region2: #{block_forward.1} parent=1 // pred_check
      _
    $region3: #{block_forward.1} parent=1 // pred_check_branch
      %14 = sbr.rel (0) target = $region5
    $region4: #{block_forward.1} parent=1 // pred_region
      _
    $region5: #{block_forward.1} parent=1 // pred_fallthru
      _
    // Predicated region
    $region6: #{block_forward.1} parent=1 // pred_check
      _
    $region7: #{block_forward.1} parent=1 // pred_check_branch
      %16 = sbr.rel (0) target = $region9
    $region8: #{block_forward.1} parent=1 // pred_region
      _
    $region9: #{block_forward.1} parent=1 // pred_fallthru
      _
    // Predicated region
    $region10: #{block_forward.1} parent=1 // pred_check
      _
    $region11: #{block_forward.1} parent=1 // pred_check_branch
      %18 = sbr.rel (0) target = $region13
    $region12: #{block_forward.1} parent=1 // pred_region
      _
    $region13: #{block_forward.1} parent=1 // pred_fallthru
      _
    // Predicated region
    $region14: #{block_forward.1} parent=1 // pred_check
      _
    $region15: #{block_forward.1} parent=1 // pred_check_branch
      %20 = sbr.rel (0) target = $region17
    $region16: #{block_forward.1} parent=1 // pred_region
      _
    $region17: #{block_forward.1} parent=1 // pred_fallthru
      _
    // Predicated region
    $region18: #{block_forward.1} parent=1 // pred_check
      _
    $region19: #{block_forward.1} parent=1 // pred_check_branch
      %22 = sbr.rel (0) target = $region21
    $region20: #{block_forward.1} parent=1 // pred_region
      _
    $region21: #{block_forward.1} parent=1 // pred_fallthru
      _
    // Predicated region
    $region22: #{block_forward.1} parent=1 // pred_check
      _
    $region23: #{block_forward.1} parent=1 // pred_check_branch
      %24 = sbr.rel (0) target = $region25
    $region24: #{block_forward.1} parent=1 // pred_region
      _
    $region25: #{block_forward.1} parent=1 // pred_fallthru
      _
    // Predicated region
    $region26: #{block_forward.1} parent=1 // pred_check
      _
    $region27: #{block_forward.1} parent=1 // pred_check_branch
      %26 = sbr.rel (0) target = $region29
    $region28: #{block_forward.1} parent=1 // pred_region
      _
    $region29: #{block_forward.1} parent=1 // pred_fallthru
      _
    %v27 = vld [vmem:[%s0] sm:$0xff]
    %v28 = vld [vmem:[%s0 + $0x8] sm:$0xff]
    %v29 = vmul.f32 %v27, %v27
    %v30 = vmul.f32 %v28, %v28
    %vm31 = vcmask 261120
    %v32 = vsel %vm31, %v29, 0.0
    %33 = vadd.xlane.f32.xlu0 %v32
    %v34 = vpop.xlane.xlu0 %33
    %v35 = vsel %vm31, %v30, 0.0
    %36 = vadd.xlane.f32.xlu0 %v35
    %v37 = vpop.xlane.xlu0 %36
    %v38 = vrcp.pop 32.0
    %v39 = vmul.f32 %v34, %v38
    %v40 = vmul.f32 %v37, %v38
    %v41 = vadd.f32 %v39, 1e-06
    %v42 = vadd.f32 %v40, 1e-06
    %v43 = vrsqrt.pop %v41
    %v44 = vrsqrt.pop %v42
    %v45 = vmul.f32 %v27, %v43
    %v46 = vmul.f32 %v28, %v44
    %v47 = vld [vmem:[%s1] sm:$0xff]
    %v48 = vld [vmem:[%s1 + $0x8] sm:$0xff]
    %v49 = vld [vmem:[%s1 + $0x10] sm:$0xff]
    %v50 = vld [vmem:[%s1 + $0x18] sm:$0xff]
    %v52 = vsel %vm31, %v45, 0
    %v55 = vsel %vm31, %v46, 0
    %57 = vmatprep.subr.mxu0 0.0
    %58 = vmatpush1.msra.mxu0 0.0
    %59 = vmatprep.subr.mxu0 0.0
    %60 = vmatpush1.msra.mxu0 0.0
    %61 = vmatprep.subr.mxu0 0.0
    %62 = vmatpush1.msra.mxu0 0.0
    %63 = vmatprep.subr.mxu0 0.0
    %64 = vmatpush1.msra.mxu0 0.0
    %65 = vmatprep.subr.mxu0 0.0
    %66 = vmatpush1.msra.mxu0 0.0
    %67 = vmatprep.subr.mxu0 0.0
    %68 = vmatpush1.msra.mxu0 0.0
    %69 = vmatprep.subr.mxu0 0.0
    %70 = vmatpush1.msra.mxu0 0.0
    %71 = vmatprep.subr.mxu0 0.0
    %72 = vmatpush1.msra.mxu0 0.0
    %73 = vmatprep.subr.mxu0 0.0
    %74 = vmatpush1.msra.mxu0 0.0
    %75 = vmatprep.subr.mxu0 0.0
    %76 = vmatpush1.msra.mxu0 0.0
    %77 = vmatprep.subr.mxu0 0.0
    %78 = vmatpush1.msra.mxu0 0.0
    %79 = vmatprep.subr.mxu0 0.0
    %80 = vmatpush1.msra.mxu0 0.0
    %81 = vmatprep.subr.mxu0 0.0
    %82 = vmatpush1.msra.mxu0 %v50
    %83 = vmatprep.subr.mxu0 0.0
    %84 = vmatpush1.msra.mxu0 %v49
    %85 = vmatprep.subr.mxu0 0.0
    %86 = vmatpush1.msra.mxu0 %v48
    %87 = vmatprep.subr.mxu0 0.0
    %88 = vmatpush1.msra.mxu0 %v47
    %89 = vmatprep.subr.mxu0 0.0
    %90 = vmatpush2.msra.mxu0 0.0
    %91 = vmatprep.subr.mxu0 0.0
    %92 = vmatpush2.msra.mxu0 0.0
    %93 = vmatprep.subr.mxu0 0.0
    %94 = vmatpush2.msra.mxu0 0.0
    %95 = vmatprep.subr.mxu0 0.0
    %96 = vmatpush2.msra.mxu0 0.0
    %97 = vmatprep.subr.mxu0 0.0
    %98 = vmatpush2.msra.mxu0 0.0
    %99 = vmatprep.subr.mxu0 0.0
    %100 = vmatpush2.msra.mxu0 0.0
    %101 = vmatprep.subr.mxu0 0.0
    %102 = vmatpush2.msra.mxu0 0.0
    %103 = vmatprep.subr.mxu0 0.0
    %104 = vmatpush2.msra.mxu0 0.0
    %105 = vmatprep.subr.mxu0 0.0
    %106 = vmatpush2.msra.mxu0 0.0
    %107 = vmatprep.subr.mxu0 0.0
    %108 = vmatpush2.msra.mxu0 0.0
    %109 = vmatprep.subr.mxu0 0.0
    %110 = vmatpush2.msra.mxu0 0.0
    %111 = vmatprep.subr.mxu0 0.0
    %112 = vmatpush2.msra.mxu0 0.0
    %113 = vmatprep.subr.mxu0 0.0
    %114 = vmatpush2.msra.mxu0 0.0
    %115 = vmatprep.subr.mxu0 0.0
    %116 = vmatpush2.msra.mxu0 0.0
    %117 = vmatprep.subr.mxu0 0.0
    %118 = vmatpush2.msra.mxu0 0.0
    %119 = vmatprep.subr.mxu0 0.0
    %120 = vmatpush2.msra.mxu0 0.0
    %121 = vmatprep.mubr.f32.mxu0 0.0
    %122 = vmatmul.mubr.f32.gmra.mxu0 %v52
    %v123 = vpop.f32.mrf.mxu0
    %v124 = vadd.f32 0.0, %v123
    %v125 = vpop.f32.mrf.mxu0
    %126 = vmatprep.mubr.f32.mxu0 0.0
    %127 = vmatmul.mubr.f32.gmra.mxu0 %v55
    %v128 = vpop.f32.mrf.mxu0
    %v129 = vadd.f32 0.0, %v128
    %v130 = vpop.f32.mrf.mxu0
    %131 = vdwg.mxu0
    %v132 = vld [vmem:[%s5] sm:$0xff]
    %v133 = vld [vmem:[%s6] sm:$0xff]
    %v134 = vlaneseq
    %v135 = vshrl.u32 %v134, 7
    %v136 = vlaneseq
    %v137 = vand.u32 %v136, 127
    %vm138 = vcmp.le.s32.totalorder %v137, %v135
    %v139 = vmul.f32 %v124, %v132
    %v140 = vmul.f32 %v129, %v132
    %142 = vrot.lane.b32.xlu0 %v133, 4
    %v143 = vpop.permute.xlu0 %142
    %v145 = vmul.f32 %v124, %v143
    %v146 = vmul.f32 %v129, %v143
    %149 = vrot.lane.b32.xlu0 %v145, 124
    %v150 = vpop.permute.xlu0 %149
    %151 = vrot.lane.b32.xlu0 %v146, 124
    %v152 = vpop.permute.xlu0 %151
    %v155 = vadd.f32 %v139, %v150
    %v156 = vadd.f32 %v140, %v152
    %158 = vrot.lane.b32.xlu0 %v132, 4
    %v159 = vpop.permute.xlu0 %158
    %v161 = vmul.f32 %v124, %v159
    %v162 = vmul.f32 %v129, %v159
    %v163 = vmul.f32 %v124, %v133
    %v164 = vmul.f32 %v129, %v133
    %167 = vrot.lane.b32.xlu0 %v163, 4
    %v168 = vpop.permute.xlu0 %167
    %169 = vrot.lane.b32.xlu0 %v164, 4
    %v170 = vpop.permute.xlu0 %169
    %v173 = vsub.f32 %v161, %v168
    %v174 = vsub.f32 %v162, %v170
    %175 = vrot.lane.b32.xlu0 %v132, 32
    %v176 = vpop.permute.xlu0 %175
    %v178 = vmul.f32 %v124, %v176
    %v179 = vmul.f32 %v129, %v176
    %180 = vrot.lane.b32.xlu0 %v133, 36
    %v181 = vpop.permute.xlu0 %180
    %v183 = vmul.f32 %v124, %v181
    %v184 = vmul.f32 %v129, %v181
    %187 = vrot.lane.b32.xlu0 %v183, 124
    %v188 = vpop.permute.xlu0 %187
    %189 = vrot.lane.b32.xlu0 %v184, 124
    %v190 = vpop.permute.xlu0 %189
    %v193 = vadd.f32 %v178, %v188
    %v194 = vadd.f32 %v179, %v190
    %195 = vrot.lane.b32.xlu0 %v132, 36
    %v196 = vpop.permute.xlu0 %195
    %v198 = vmul.f32 %v124, %v196
    %v199 = vmul.f32 %v129, %v196
    %200 = vrot.lane.b32.xlu0 %v133, 32
    %v201 = vpop.permute.xlu0 %200
    %v203 = vmul.f32 %v124, %v201
    %v204 = vmul.f32 %v129, %v201
    %207 = vrot.lane.b32.xlu0 %v203, 4
    %v208 = vpop.permute.xlu0 %207
    %209 = vrot.lane.b32.xlu0 %v204, 4
    %v210 = vpop.permute.xlu0 %209
    %v213 = vsub.f32 %v198, %v208
    %v214 = vsub.f32 %v199, %v210
    %216 = vrot.lane.b32.xlu0 %v173, 124
    %v217 = vpop.permute.xlu0 %216
    %219 = vrot.lane.b32.xlu0 %v213, 92
    %v220 = vpop.permute.xlu0 %219
    %vm221 = vcmask 31744
    %v222 = vsel %vm221, %v217, 0
    %v224 = vsel %vm221, %v220, 0
    %226 = vmatprep.subr.mxu0 0.0
    %227 = vmatpush1.xpose.msra.mxu0 0.0
    %228 = vmatprep.subr.mxu0 0.0
    %229 = vmatpush1.xpose.msra.mxu0 0.0
    %230 = vmatprep.subr.mxu0 0.0
    %231 = vmatpush1.xpose.msra.mxu0 0.0
    %232 = vmatprep.subr.mxu0 0.0
    %233 = vmatpush1.xpose.msra.mxu0 0.0
    %234 = vmatprep.subr.mxu0 0.0
    %235 = vmatpush1.xpose.msra.mxu0 0.0
    %236 = vmatprep.subr.mxu0 0.0
    %237 = vmatpush1.xpose.msra.mxu0 0.0
    %238 = vmatprep.subr.mxu0 0.0
    %239 = vmatpush1.xpose.msra.mxu0 0.0
    %240 = vmatprep.subr.mxu0 0.0
    %241 = vmatpush1.xpose.msra.mxu0 0.0
    %242 = vmatprep.subr.mxu0 0.0
    %243 = vmatpush1.xpose.msra.mxu0 0.0
    %244 = vmatprep.subr.mxu0 0.0
    %245 = vmatpush1.xpose.msra.mxu0 0.0
    %246 = vmatprep.subr.mxu0 0.0
    %247 = vmatpush1.xpose.msra.mxu0 0.0
    %248 = vmatprep.subr.mxu0 0.0
    %249 = vmatpush1.xpose.msra.mxu0 0.0
    %250 = vmatprep.subr.mxu0 0.0
    %251 = vmatpush1.xpose.msra.mxu0 0.0
    %252 = vmatprep.subr.mxu0 0.0
    %253 = vmatpush1.xpose.msra.mxu0 0.0
    %254 = vmatprep.subr.mxu0 0.0
    %255 = vmatpush1.xpose.msra.mxu0 0.0
    %256 = vmatprep.subr.mxu0 0.0
    %257 = vmatpush1.xpose.msra.mxu0 %v224
    %258 = vmatprep.subr.mxu0 0.0
    %259 = vmatpush2.xpose.msra.mxu0 0.0
    %260 = vmatprep.subr.mxu0 0.0
    %261 = vmatpush2.xpose.msra.mxu0 0.0
    %262 = vmatprep.subr.mxu0 0.0
    %263 = vmatpush2.xpose.msra.mxu0 0.0
    %264 = vmatprep.subr.mxu0 0.0
    %265 = vmatpush2.xpose.msra.mxu0 0.0
    %266 = vmatprep.subr.mxu0 0.0
    %267 = vmatpush2.xpose.msra.mxu0 0.0
    %268 = vmatprep.subr.mxu0 0.0
    %269 = vmatpush2.xpose.msra.mxu0 0.0
    %270 = vmatprep.subr.mxu0 0.0
    %271 = vmatpush2.xpose.msra.mxu0 0.0
    %272 = vmatprep.subr.mxu0 0.0
    %273 = vmatpush2.xpose.msra.mxu0 0.0
    %274 = vmatprep.subr.mxu0 0.0
    %275 = vmatpush2.xpose.msra.mxu0 0.0
    %276 = vmatprep.subr.mxu0 0.0
    %277 = vmatpush2.xpose.msra.mxu0 0.0
    %278 = vmatprep.subr.mxu0 0.0
    %279 = vmatpush2.xpose.msra.mxu0 0.0
    %280 = vmatprep.subr.mxu0 0.0
    %281 = vmatpush2.xpose.msra.mxu0 0.0
    %282 = vmatprep.subr.mxu0 0.0
    %283 = vmatpush2.xpose.msra.mxu0 0.0
    %284 = vmatprep.subr.mxu0 0.0
    %285 = vmatpush2.xpose.msra.mxu0 0.0
    %286 = vmatprep.subr.mxu0 0.0
    %287 = vmatpush2.xpose.msra.mxu0 0.0
    %288 = vmatprep.subr.mxu0 0.0
    %289 = vmatpush2.xpose.msra.mxu0 0.0
    %290 = vmatprep.mubr.f32.mxu0 0.0
    %291 = vmatmul.mubr.f32.gmra.mxu0 %v222
    %v292 = vpop.f32.mrf.mxu0
    %v293 = vadd.f32 0.0, %v292
    %v294 = vpop.f32.mrf.mxu0
    %295 = vdwg.mxu0
    %297 = vrot.lane.b32.xlu0 %v174, 124
    %v298 = vpop.permute.xlu0 %297
    %300 = vrot.lane.b32.xlu0 %v214, 92
    %v301 = vpop.permute.xlu0 %300
    %v302 = vsel %vm221, %v298, 0
    %v304 = vsel %vm221, %v301, 0
    %306 = vmatprep.subr.mxu0 0.0
    %307 = vmatpush1.xpose.msra.mxu0 0.0
    %308 = vmatprep.subr.mxu0 0.0
    %309 = vmatpush1.xpose.msra.mxu0 0.0
    %310 = vmatprep.subr.mxu0 0.0
    %311 = vmatpush1.xpose.msra.mxu0 0.0
    %312 = vmatprep.subr.mxu0 0.0
    %313 = vmatpush1.xpose.msra.mxu0 0.0
    %314 = vmatprep.subr.mxu0 0.0
    %315 = vmatpush1.xpose.msra.mxu0 0.0
    %316 = vmatprep.subr.mxu0 0.0
    %317 = vmatpush1.xpose.msra.mxu0 0.0
    %318 = vmatprep.subr.mxu0 0.0
    %319 = vmatpush1.xpose.msra.mxu0 0.0
    %320 = vmatprep.subr.mxu0 0.0
    %321 = vmatpush1.xpose.msra.mxu0 0.0
    %322 = vmatprep.subr.mxu0 0.0
    %323 = vmatpush1.xpose.msra.mxu0 0.0
    %324 = vmatprep.subr.mxu0 0.0
    %325 = vmatpush1.xpose.msra.mxu0 0.0
    %326 = vmatprep.subr.mxu0 0.0
    %327 = vmatpush1.xpose.msra.mxu0 0.0
    %328 = vmatprep.subr.mxu0 0.0
    %329 = vmatpush1.xpose.msra.mxu0 0.0
    %330 = vmatprep.subr.mxu0 0.0
    %331 = vmatpush1.xpose.msra.mxu0 0.0
    %332 = vmatprep.subr.mxu0 0.0
    %333 = vmatpush1.xpose.msra.mxu0 0.0
    %334 = vmatprep.subr.mxu0 0.0
    %335 = vmatpush1.xpose.msra.mxu0 0.0
    %336 = vmatprep.subr.mxu0 0.0
    %337 = vmatpush1.xpose.msra.mxu0 %v304
    %338 = vmatprep.subr.mxu0 0.0
    %339 = vmatpush2.xpose.msra.mxu0 0.0
    %340 = vmatprep.subr.mxu0 0.0
    %341 = vmatpush2.xpose.msra.mxu0 0.0
    %342 = vmatprep.subr.mxu0 0.0
    %343 = vmatpush2.xpose.msra.mxu0 0.0
    %344 = vmatprep.subr.mxu0 0.0
    %345 = vmatpush2.xpose.msra.mxu0 0.0
    %346 = vmatprep.subr.mxu0 0.0
    %347 = vmatpush2.xpose.msra.mxu0 0.0
    %348 = vmatprep.subr.mxu0 0.0
    %349 = vmatpush2.xpose.msra.mxu0 0.0
    %350 = vmatprep.subr.mxu0 0.0
    %351 = vmatpush2.xpose.msra.mxu0 0.0
    %352 = vmatprep.subr.mxu0 0.0
    %353 = vmatpush2.xpose.msra.mxu0 0.0
    %354 = vmatprep.subr.mxu0 0.0
    %355 = vmatpush2.xpose.msra.mxu0 0.0
    %356 = vmatprep.subr.mxu0 0.0
    %357 = vmatpush2.xpose.msra.mxu0 0.0
    %358 = vmatprep.subr.mxu0 0.0
    %359 = vmatpush2.xpose.msra.mxu0 0.0
    %360 = vmatprep.subr.mxu0 0.0
    %361 = vmatpush2.xpose.msra.mxu0 0.0
    %362 = vmatprep.subr.mxu0 0.0
    %363 = vmatpush2.xpose.msra.mxu0 0.0
    %364 = vmatprep.subr.mxu0 0.0
    %365 = vmatpush2.xpose.msra.mxu0 0.0
    %366 = vmatprep.subr.mxu0 0.0
    %367 = vmatpush2.xpose.msra.mxu0 0.0
    %368 = vmatprep.subr.mxu0 0.0
    %369 = vmatpush2.xpose.msra.mxu0 0.0
    %370 = vmatprep.mubr.f32.mxu0 0.0
    %371 = vmatmul.mubr.f32.gmra.mxu0 %v302
    %v372 = vpop.f32.mrf.mxu0
    %v373 = vadd.f32 0.0, %v372
    %v374 = vpop.f32.mrf.mxu0
    %375 = vdwg.mxu0
    %377 = vrot.lane.b32.xlu0 %v193, 96
    %v378 = vpop.permute.xlu0 %377
    %v380 = vsel %vm221, %v155, 0
    %v382 = vsel %vm221, %v378, 0
    %384 = vmatprep.subr.mxu0 0.0
    %385 = vmatpush1.xpose.msra.mxu0 0.0
    %386 = vmatprep.subr.mxu0 0.0
    %387 = vmatpush1.xpose.msra.mxu0 0.0
    %388 = vmatprep.subr.mxu0 0.0
    %389 = vmatpush1.xpose.msra.mxu0 0.0
    %390 = vmatprep.subr.mxu0 0.0
    %391 = vmatpush1.xpose.msra.mxu0 0.0
    %392 = vmatprep.subr.mxu0 0.0
    %393 = vmatpush1.xpose.msra.mxu0 0.0
    %394 = vmatprep.subr.mxu0 0.0
    %395 = vmatpush1.xpose.msra.mxu0 0.0
    %396 = vmatprep.subr.mxu0 0.0
    %397 = vmatpush1.xpose.msra.mxu0 0.0
    %398 = vmatprep.subr.mxu0 0.0
    %399 = vmatpush1.xpose.msra.mxu0 0.0
    %400 = vmatprep.subr.mxu0 0.0
    %401 = vmatpush1.xpose.msra.mxu0 0.0
    %402 = vmatprep.subr.mxu0 0.0
    %403 = vmatpush1.xpose.msra.mxu0 0.0
    %404 = vmatprep.subr.mxu0 0.0
    %405 = vmatpush1.xpose.msra.mxu0 0.0
    %406 = vmatprep.subr.mxu0 0.0
    %407 = vmatpush1.xpose.msra.mxu0 0.0
    %408 = vmatprep.subr.mxu0 0.0
    %409 = vmatpush1.xpose.msra.mxu0 0.0
    %410 = vmatprep.subr.mxu0 0.0
    %411 = vmatpush1.xpose.msra.mxu0 0.0
    %412 = vmatprep.subr.mxu0 0.0
    %413 = vmatpush1.xpose.msra.mxu0 0.0
    %414 = vmatprep.subr.mxu0 0.0
    %415 = vmatpush1.xpose.msra.mxu0 %v382
    %416 = vmatprep.subr.mxu0 0.0
    %417 = vmatpush2.xpose.msra.mxu0 0.0
    %418 = vmatprep.subr.mxu0 0.0
    %419 = vmatpush2.xpose.msra.mxu0 0.0
    %420 = vmatprep.subr.mxu0 0.0
    %421 = vmatpush2.xpose.msra.mxu0 0.0
    %422 = vmatprep.subr.mxu0 0.0
    %423 = vmatpush2.xpose.msra.mxu0 0.0
    %424 = vmatprep.subr.mxu0 0.0
    %425 = vmatpush2.xpose.msra.mxu0 0.0
    %426 = vmatprep.subr.mxu0 0.0
    %427 = vmatpush2.xpose.msra.mxu0 0.0
    %428 = vmatprep.subr.mxu0 0.0
    %429 = vmatpush2.xpose.msra.mxu0 0.0
    %430 = vmatprep.subr.mxu0 0.0
    %431 = vmatpush2.xpose.msra.mxu0 0.0
    %432 = vmatprep.subr.mxu0 0.0
    %433 = vmatpush2.xpose.msra.mxu0 0.0
    %434 = vmatprep.subr.mxu0 0.0
    %435 = vmatpush2.xpose.msra.mxu0 0.0
    %436 = vmatprep.subr.mxu0 0.0
    %437 = vmatpush2.xpose.msra.mxu0 0.0
    %438 = vmatprep.subr.mxu0 0.0
    %439 = vmatpush2.xpose.msra.mxu0 0.0
    %440 = vmatprep.subr.mxu0 0.0
    %441 = vmatpush2.xpose.msra.mxu0 0.0
    %442 = vmatprep.subr.mxu0 0.0
    %443 = vmatpush2.xpose.msra.mxu0 0.0
    %444 = vmatprep.subr.mxu0 0.0
    %445 = vmatpush2.xpose.msra.mxu0 0.0
    %446 = vmatprep.subr.mxu0 0.0
    %447 = vmatpush2.xpose.msra.mxu0 0.0
    %448 = vmatprep.mubr.f32.mxu0 0.0
    %449 = vmatmul.mubr.f32.gmra.mxu0 %v380
    %v450 = vpop.f32.mrf.mxu0
    %v451 = vadd.f32 %v293, %v450
    %v452 = vpop.f32.mrf.mxu0
    %453 = vdwg.mxu0
    %455 = vrot.lane.b32.xlu0 %v194, 96
    %v456 = vpop.permute.xlu0 %455
    %v458 = vsel %vm221, %v156, 0
    %v460 = vsel %vm221, %v456, 0
    %462 = vmatprep.subr.mxu0 0.0
    %463 = vmatpush1.xpose.msra.mxu0 0.0
    %464 = vmatprep.subr.mxu0 0.0
    %465 = vmatpush1.xpose.msra.mxu0 0.0
    %466 = vmatprep.subr.mxu0 0.0
    %467 = vmatpush1.xpose.msra.mxu0 0.0
    %468 = vmatprep.subr.mxu0 0.0
    %469 = vmatpush1.xpose.msra.mxu0 0.0
    %470 = vmatprep.subr.mxu0 0.0
    %471 = vmatpush1.xpose.msra.mxu0 0.0
    %472 = vmatprep.subr.mxu0 0.0
    %473 = vmatpush1.xpose.msra.mxu0 0.0
    %474 = vmatprep.subr.mxu0 0.0
    %475 = vmatpush1.xpose.msra.mxu0 0.0
    %476 = vmatprep.subr.mxu0 0.0
    %477 = vmatpush1.xpose.msra.mxu0 0.0
    %478 = vmatprep.subr.mxu0 0.0
    %479 = vmatpush1.xpose.msra.mxu0 0.0
    %480 = vmatprep.subr.mxu0 0.0
    %481 = vmatpush1.xpose.msra.mxu0 0.0
    %482 = vmatprep.subr.mxu0 0.0
    %483 = vmatpush1.xpose.msra.mxu0 0.0
    %484 = vmatprep.subr.mxu0 0.0
    %485 = vmatpush1.xpose.msra.mxu0 0.0
    %486 = vmatprep.subr.mxu0 0.0
    %487 = vmatpush1.xpose.msra.mxu0 0.0
    %488 = vmatprep.subr.mxu0 0.0
    %489 = vmatpush1.xpose.msra.mxu0 0.0
    %490 = vmatprep.subr.mxu0 0.0
    %491 = vmatpush1.xpose.msra.mxu0 0.0
    %492 = vmatprep.subr.mxu0 0.0
    %493 = vmatpush1.xpose.msra.mxu0 %v460
    %494 = vmatprep.subr.mxu0 0.0
    %495 = vmatpush2.xpose.msra.mxu0 0.0
    %496 = vmatprep.subr.mxu0 0.0
    %497 = vmatpush2.xpose.msra.mxu0 0.0
    %498 = vmatprep.subr.mxu0 0.0
    %499 = vmatpush2.xpose.msra.mxu0 0.0
    %500 = vmatprep.subr.mxu0 0.0
    %501 = vmatpush2.xpose.msra.mxu0 0.0
    %502 = vmatprep.subr.mxu0 0.0
    %503 = vmatpush2.xpose.msra.mxu0 0.0
    %504 = vmatprep.subr.mxu0 0.0
    %505 = vmatpush2.xpose.msra.mxu0 0.0
    %506 = vmatprep.subr.mxu0 0.0
    %507 = vmatpush2.xpose.msra.mxu0 0.0
    %508 = vmatprep.subr.mxu0 0.0
    %509 = vmatpush2.xpose.msra.mxu0 0.0
    %510 = vmatprep.subr.mxu0 0.0
    %511 = vmatpush2.xpose.msra.mxu0 0.0
    %512 = vmatprep.subr.mxu0 0.0
    %513 = vmatpush2.xpose.msra.mxu0 0.0
    %514 = vmatprep.subr.mxu0 0.0
    %515 = vmatpush2.xpose.msra.mxu0 0.0
    %516 = vmatprep.subr.mxu0 0.0
    %517 = vmatpush2.xpose.msra.mxu0 0.0
    %518 = vmatprep.subr.mxu0 0.0
    %519 = vmatpush2.xpose.msra.mxu0 0.0
    %520 = vmatprep.subr.mxu0 0.0
    %521 = vmatpush2.xpose.msra.mxu0 0.0
    %522 = vmatprep.subr.mxu0 0.0
    %523 = vmatpush2.xpose.msra.mxu0 0.0
    %524 = vmatprep.subr.mxu0 0.0
    %525 = vmatpush2.xpose.msra.mxu0 0.0
    %526 = vmatprep.mubr.f32.mxu0 0.0
    %527 = vmatmul.mubr.f32.gmra.mxu0 %v458
    %v528 = vpop.f32.mrf.mxu0
    %v529 = vadd.f32 %v373, %v528
    %v530 = vpop.f32.mrf.mxu0
    %531 = vdwg.mxu0
    %v532 = vsel %vm138, 1, 0
    %vm533 = vcmp.eq.s32.totalorder %v532, 1
    %v534 = vsel %vm533, %v451, -1e+30
    %v535 = vsel %vm533, %v529, -1e+30
    %vm536 = vcmask 64512
    %v537 = vsel %vm536, %v534, -inf
    %538 = vmax.xlane.f32.xlu0 %v537
    %v539 = vpop.xlane.xlu0 %538
    %v540 = vsel %vm536, %v535, -inf
    %541 = vmax.xlane.f32.xlu0 %v540
    %v542 = vpop.xlane.xlu0 %541
    %v543 = vsub.f32 %v534, %v539
    %v544 = vsub.f32 %v535, %v542
    %v545 = vmul.f32 %v543, 1.442695
    %v546 = vpow.pop %v545
    %v547 = vmul.f32 %v544, 1.442695
    %v548 = vpow.pop %v547
    %v549 = vsel %vm536, %v546, 0.0
    %550 = vadd.xlane.f32.xlu0 %v549
    %v551 = vpop.xlane.xlu0 %550
    %v552 = vsel %vm536, %v548, 0.0
    %553 = vadd.xlane.f32.xlu0 %v552
    %v554 = vpop.xlane.xlu0 %553
    %556 = vrot.lane.b32.xlu0 %v124, 64
    %v557 = vpop.permute.xlu0 %556
    %v560 = vsel %vm536, %v546, 0
    %562 = vmatprep.subr.mxu0 0.0
    %563 = vmatpush1.msra.mxu0 0.0
    %564 = vmatprep.subr.mxu0 0.0
    %565 = vmatpush1.msra.mxu0 0.0
    %566 = vmatprep.subr.mxu0 0.0
    %567 = vmatpush1.msra.mxu0 0.0
    %568 = vmatprep.subr.mxu0 0.0
    %569 = vmatpush1.msra.mxu0 0.0
    %570 = vmatprep.subr.mxu0 0.0
    %571 = vmatpush1.msra.mxu0 0.0
    %572 = vmatprep.subr.mxu0 0.0
    %573 = vmatpush1.msra.mxu0 0.0
    %574 = vmatprep.subr.mxu0 0.0
    %575 = vmatpush1.msra.mxu0 0.0
    %576 = vmatprep.subr.mxu0 0.0
    %577 = vmatpush1.msra.mxu0 0.0
    %578 = vmatprep.subr.mxu0 0.0
    %579 = vmatpush1.msra.mxu0 0.0
    %580 = vmatprep.subr.mxu0 0.0
    %581 = vmatpush1.msra.mxu0 0.0
    %582 = vmatprep.subr.mxu0 0.0
    %583 = vmatpush1.msra.mxu0 0.0
    %584 = vmatprep.subr.mxu0 0.0
    %585 = vmatpush1.msra.mxu0 0.0
    %586 = vmatprep.subr.mxu0 0.0
    %587 = vmatpush1.msra.mxu0 0.0
    %588 = vmatprep.subr.mxu0 0.0
    %589 = vmatpush1.msra.mxu0 0.0
    %590 = vmatprep.subr.mxu0 0.0
    %591 = vmatpush1.msra.mxu0 0.0
    %592 = vmatprep.subr.mxu0 0.0
    %593 = vmatpush1.msra.mxu0 %v557
    %594 = vmatprep.subr.mxu0 0.0
    %595 = vmatpush2.msra.mxu0 0.0
    %596 = vmatprep.subr.mxu0 0.0
    %597 = vmatpush2.msra.mxu0 0.0
    %598 = vmatprep.subr.mxu0 0.0
    %599 = vmatpush2.msra.mxu0 0.0
    %600 = vmatprep.subr.mxu0 0.0
    %601 = vmatpush2.msra.mxu0 0.0
    %602 = vmatprep.subr.mxu0 0.0
    %603 = vmatpush2.msra.mxu0 0.0
    %604 = vmatprep.subr.mxu0 0.0
    %605 = vmatpush2.msra.mxu0 0.0
    %606 = vmatprep.subr.mxu0 0.0
    %607 = vmatpush2.msra.mxu0 0.0
    %608 = vmatprep.subr.mxu0 0.0
    %609 = vmatpush2.msra.mxu0 0.0
    %610 = vmatprep.subr.mxu0 0.0
    %611 = vmatpush2.msra.mxu0 0.0
    %612 = vmatprep.subr.mxu0 0.0
    %613 = vmatpush2.msra.mxu0 0.0
    %614 = vmatprep.subr.mxu0 0.0
    %615 = vmatpush2.msra.mxu0 0.0
    %616 = vmatprep.subr.mxu0 0.0
    %617 = vmatpush2.msra.mxu0 0.0
    %618 = vmatprep.subr.mxu0 0.0
    %619 = vmatpush2.msra.mxu0 0.0
    %620 = vmatprep.subr.mxu0 0.0
    %621 = vmatpush2.msra.mxu0 0.0
    %622 = vmatprep.subr.mxu0 0.0
    %623 = vmatpush2.msra.mxu0 0.0
    %624 = vmatprep.subr.mxu0 0.0
    %625 = vmatpush2.msra.mxu0 0.0
    %626 = vmatprep.mubr.f32.mxu0 0.0
    %627 = vmatmul.mubr.f32.gmra.mxu0 %v560
    %v628 = vpop.f32.mrf.mxu0
    %v629 = vadd.f32 0.0, %v628
    %v630 = vpop.f32.mrf.mxu0
    %631 = vdwg.mxu0
    %633 = vrot.lane.b32.xlu0 %v129, 64
    %v634 = vpop.permute.xlu0 %633
    %v637 = vsel %vm536, %v548, 0
    %639 = vmatprep.subr.mxu0 0.0
    %640 = vmatpush1.msra.mxu0 0.0
    %641 = vmatprep.subr.mxu0 0.0
    %642 = vmatpush1.msra.mxu0 0.0
    %643 = vmatprep.subr.mxu0 0.0
    %644 = vmatpush1.msra.mxu0 0.0
    %645 = vmatprep.subr.mxu0 0.0
    %646 = vmatpush1.msra.mxu0 0.0
    %647 = vmatprep.subr.mxu0 0.0
    %648 = vmatpush1.msra.mxu0 0.0
    %649 = vmatprep.subr.mxu0 0.0
    %650 = vmatpush1.msra.mxu0 0.0
    %651 = vmatprep.subr.mxu0 0.0
    %652 = vmatpush1.msra.mxu0 0.0
    %653 = vmatprep.subr.mxu0 0.0
    %654 = vmatpush1.msra.mxu0 0.0
    %655 = vmatprep.subr.mxu0 0.0
    %656 = vmatpush1.msra.mxu0 0.0
    %657 = vmatprep.subr.mxu0 0.0
    %658 = vmatpush1.msra.mxu0 0.0
    %659 = vmatprep.subr.mxu0 0.0
    %660 = vmatpush1.msra.mxu0 0.0
    %661 = vmatprep.subr.mxu0 0.0
    %662 = vmatpush1.msra.mxu0 0.0
    %663 = vmatprep.subr.mxu0 0.0
    %664 = vmatpush1.msra.mxu0 0.0
    %665 = vmatprep.subr.mxu0 0.0
    %666 = vmatpush1.msra.mxu0 0.0
    %667 = vmatprep.subr.mxu0 0.0
    %668 = vmatpush1.msra.mxu0 0.0
    %669 = vmatprep.subr.mxu0 0.0
    %670 = vmatpush1.msra.mxu0 %v634
    %671 = vmatprep.subr.mxu0 0.0
    %672 = vmatpush2.msra.mxu0 0.0
    %673 = vmatprep.subr.mxu0 0.0
    %674 = vmatpush2.msra.mxu0 0.0
    %675 = vmatprep.subr.mxu0 0.0
    %676 = vmatpush2.msra.mxu0 0.0
    %677 = vmatprep.subr.mxu0 0.0
    %678 = vmatpush2.msra.mxu0 0.0
    %679 = vmatprep.subr.mxu0 0.0
    %680 = vmatpush2.msra.mxu0 0.0
    %681 = vmatprep.subr.mxu0 0.0
    %682 = vmatpush2.msra.mxu0 0.0
    %683 = vmatprep.subr.mxu0 0.0
    %684 = vmatpush2.msra.mxu0 0.0
    %685 = vmatprep.subr.mxu0 0.0
    %686 = vmatpush2.msra.mxu0 0.0
    %687 = vmatprep.subr.mxu0 0.0
    %688 = vmatpush2.msra.mxu0 0.0
    %689 = vmatprep.subr.mxu0 0.0
    %690 = vmatpush2.msra.mxu0 0.0
    %691 = vmatprep.subr.mxu0 0.0
    %692 = vmatpush2.msra.mxu0 0.0
    %693 = vmatprep.subr.mxu0 0.0
    %694 = vmatpush2.msra.mxu0 0.0
    %695 = vmatprep.subr.mxu0 0.0
    %696 = vmatpush2.msra.mxu0 0.0
    %697 = vmatprep.subr.mxu0 0.0
    %698 = vmatpush2.msra.mxu0 0.0
    %699 = vmatprep.subr.mxu0 0.0
    %700 = vmatpush2.msra.mxu0 0.0
    %701 = vmatprep.subr.mxu0 0.0
    %702 = vmatpush2.msra.mxu0 0.0
    %703 = vmatprep.mubr.f32.mxu0 0.0
    %704 = vmatmul.mubr.f32.gmra.mxu0 %v637
    %v705 = vpop.f32.mrf.mxu0
    %v706 = vadd.f32 0.0, %v705
    %v707 = vpop.f32.mrf.mxu0
    %708 = vdwg.mxu0
    %v709 = vrcp.pop %v551
    %v710 = vrcp.pop %v554
    %v711 = vmul.f32 %v629, %v709
    %v712 = vmul.f32 %v706, %v710
    %713 = vrot.lane.b32.xlu0 %v132, 8
    %v714 = vpop.permute.xlu0 %713
    %v716 = vmul.f32 %v124, %v714
    %v717 = vmul.f32 %v129, %v714
    %718 = vrot.lane.b32.xlu0 %v133, 12
    %v719 = vpop.permute.xlu0 %718
    %v721 = vmul.f32 %v124, %v719
    %v722 = vmul.f32 %v129, %v719
    %725 = vrot.lane.b32.xlu0 %v721, 124
    %v726 = vpop.permute.xlu0 %725
    %727 = vrot.lane.b32.xlu0 %v722, 124
    %v728 = vpop.permute.xlu0 %727
    %v731 = vadd.f32 %v716, %v726
    %v732 = vadd.f32 %v717, %v728
    %733 = vrot.lane.b32.xlu0 %v132, 12
    %v734 = vpop.permute.xlu0 %733
    %v736 = vmul.f32 %v124, %v734
    %v737 = vmul.f32 %v129, %v734
    %738 = vrot.lane.b32.xlu0 %v133, 8
    %v739 = vpop.permute.xlu0 %738
    %v741 = vmul.f32 %v124, %v739
    %v742 = vmul.f32 %v129, %v739
    %745 = vrot.lane.b32.xlu0 %v741, 4
    %v746 = vpop.permute.xlu0 %745
    %747 = vrot.lane.b32.xlu0 %v742, 4
    %v748 = vpop.permute.xlu0 %747
    %v751 = vsub.f32 %v736, %v746
    %v752 = vsub.f32 %v737, %v748
    %753 = vrot.lane.b32.xlu0 %v132, 40
    %v754 = vpop.permute.xlu0 %753
    %v756 = vmul.f32 %v124, %v754
    %v757 = vmul.f32 %v129, %v754
    %758 = vrot.lane.b32.xlu0 %v133, 44
    %v759 = vpop.permute.xlu0 %758
    %v761 = vmul.f32 %v124, %v759
    %v762 = vmul.f32 %v129, %v759
    %765 = vrot.lane.b32.xlu0 %v761, 124
    %v766 = vpop.permute.xlu0 %765
    %767 = vrot.lane.b32.xlu0 %v762, 124
    %v768 = vpop.permute.xlu0 %767
    %v771 = vadd.f32 %v756, %v766
    %v772 = vadd.f32 %v757, %v768
    %773 = vrot.lane.b32.xlu0 %v132, 44
    %v774 = vpop.permute.xlu0 %773
    %v776 = vmul.f32 %v124, %v774
    %v777 = vmul.f32 %v129, %v774
    %778 = vrot.lane.b32.xlu0 %v133, 40
    %v779 = vpop.permute.xlu0 %778
    %v781 = vmul.f32 %v124, %v779
    %v782 = vmul.f32 %v129, %v779
    %785 = vrot.lane.b32.xlu0 %v781, 4
    %v786 = vpop.permute.xlu0 %785
    %787 = vrot.lane.b32.xlu0 %v782, 4
    %v788 = vpop.permute.xlu0 %787
    %v791 = vsub.f32 %v776, %v786
    %v792 = vsub.f32 %v777, %v788
    %794 = vrot.lane.b32.xlu0 %v751, 116
    %v795 = vpop.permute.xlu0 %794
    %797 = vrot.lane.b32.xlu0 %v791, 84
    %v798 = vpop.permute.xlu0 %797
    %v799 = vsel %vm221, %v795, 0
    %v801 = vsel %vm221, %v798, 0
    %803 = vmatprep.subr.mxu0 0.0
    %804 = vmatpush1.xpose.msra.mxu0 0.0
    %805 = vmatprep.subr.mxu0 0.0
    %806 = vmatpush1.xpose.msra.mxu0 0.0
    %807 = vmatprep.subr.mxu0 0.0
    %808 = vmatpush1.xpose.msra.mxu0 0.0
    %809 = vmatprep.subr.mxu0 0.0
    %810 = vmatpush1.xpose.msra.mxu0 0.0
    %811 = vmatprep.subr.mxu0 0.0
    %812 = vmatpush1.xpose.msra.mxu0 0.0
    %813 = vmatprep.subr.mxu0 0.0
    %814 = vmatpush1.xpose.msra.mxu0 0.0
    %815 = vmatprep.subr.mxu0 0.0
    %816 = vmatpush1.xpose.msra.mxu0 0.0
    %817 = vmatprep.subr.mxu0 0.0
    %818 = vmatpush1.xpose.msra.mxu0 0.0
    %819 = vmatprep.subr.mxu0 0.0
    %820 = vmatpush1.xpose.msra.mxu0 0.0
    %821 = vmatprep.subr.mxu0 0.0
    %822 = vmatpush1.xpose.msra.mxu0 0.0
    %823 = vmatprep.subr.mxu0 0.0
    %824 = vmatpush1.xpose.msra.mxu0 0.0
    %825 = vmatprep.subr.mxu0 0.0
    %826 = vmatpush1.xpose.msra.mxu0 0.0
    %827 = vmatprep.subr.mxu0 0.0
    %828 = vmatpush1.xpose.msra.mxu0 0.0
    %829 = vmatprep.subr.mxu0 0.0
    %830 = vmatpush1.xpose.msra.mxu0 0.0
    %831 = vmatprep.subr.mxu0 0.0
    %832 = vmatpush1.xpose.msra.mxu0 0.0
    %833 = vmatprep.subr.mxu0 0.0
    %834 = vmatpush1.xpose.msra.mxu0 %v801
    %835 = vmatprep.subr.mxu0 0.0
    %836 = vmatpush2.xpose.msra.mxu0 0.0
    %837 = vmatprep.subr.mxu0 0.0
    %838 = vmatpush2.xpose.msra.mxu0 0.0
    %839 = vmatprep.subr.mxu0 0.0
    %840 = vmatpush2.xpose.msra.mxu0 0.0
    %841 = vmatprep.subr.mxu0 0.0
    %842 = vmatpush2.xpose.msra.mxu0 0.0
    %843 = vmatprep.subr.mxu0 0.0
    %844 = vmatpush2.xpose.msra.mxu0 0.0
    %845 = vmatprep.subr.mxu0 0.0
    %846 = vmatpush2.xpose.msra.mxu0 0.0
    %847 = vmatprep.subr.mxu0 0.0
    %848 = vmatpush2.xpose.msra.mxu0 0.0
    %849 = vmatprep.subr.mxu0 0.0
    %850 = vmatpush2.xpose.msra.mxu0 0.0
    %851 = vmatprep.subr.mxu0 0.0
    %852 = vmatpush2.xpose.msra.mxu0 0.0
    %853 = vmatprep.subr.mxu0 0.0
    %854 = vmatpush2.xpose.msra.mxu0 0.0
    %855 = vmatprep.subr.mxu0 0.0
    %856 = vmatpush2.xpose.msra.mxu0 0.0
    %857 = vmatprep.subr.mxu0 0.0
    %858 = vmatpush2.xpose.msra.mxu0 0.0
    %859 = vmatprep.subr.mxu0 0.0
    %860 = vmatpush2.xpose.msra.mxu0 0.0
    %861 = vmatprep.subr.mxu0 0.0
    %862 = vmatpush2.xpose.msra.mxu0 0.0
    %863 = vmatprep.subr.mxu0 0.0
    %864 = vmatpush2.xpose.msra.mxu0 0.0
    %865 = vmatprep.subr.mxu0 0.0
    %866 = vmatpush2.xpose.msra.mxu0 0.0
    %867 = vmatprep.mubr.f32.mxu0 0.0
    %868 = vmatmul.mubr.f32.gmra.mxu0 %v799
    %v869 = vpop.f32.mrf.mxu0
    %v870 = vadd.f32 0.0, %v869
    %v871 = vpop.f32.mrf.mxu0
    %872 = vdwg.mxu0
    %874 = vrot.lane.b32.xlu0 %v752, 116
    %v875 = vpop.permute.xlu0 %874
    %877 = vrot.lane.b32.xlu0 %v792, 84
    %v878 = vpop.permute.xlu0 %877
    %v879 = vsel %vm221, %v875, 0
    %v881 = vsel %vm221, %v878, 0
    %883 = vmatprep.subr.mxu0 0.0
    %884 = vmatpush1.xpose.msra.mxu0 0.0
    %885 = vmatprep.subr.mxu0 0.0
    %886 = vmatpush1.xpose.msra.mxu0 0.0
    %887 = vmatprep.subr.mxu0 0.0
    %888 = vmatpush1.xpose.msra.mxu0 0.0
    %889 = vmatprep.subr.mxu0 0.0
    %890 = vmatpush1.xpose.msra.mxu0 0.0
    %891 = vmatprep.subr.mxu0 0.0
    %892 = vmatpush1.xpose.msra.mxu0 0.0
    %893 = vmatprep.subr.mxu0 0.0
    %894 = vmatpush1.xpose.msra.mxu0 0.0
    %895 = vmatprep.subr.mxu0 0.0
    %896 = vmatpush1.xpose.msra.mxu0 0.0
    %897 = vmatprep.subr.mxu0 0.0
    %898 = vmatpush1.xpose.msra.mxu0 0.0
    %899 = vmatprep.subr.mxu0 0.0
    %900 = vmatpush1.xpose.msra.mxu0 0.0
    %901 = vmatprep.subr.mxu0 0.0
    %902 = vmatpush1.xpose.msra.mxu0 0.0
    %903 = vmatprep.subr.mxu0 0.0
    %904 = vmatpush1.xpose.msra.mxu0 0.0
    %905 = vmatprep.subr.mxu0 0.0
    %906 = vmatpush1.xpose.msra.mxu0 0.0
    %907 = vmatprep.subr.mxu0 0.0
    %908 = vmatpush1.xpose.msra.mxu0 0.0
    %909 = vmatprep.subr.mxu0 0.0
    %910 = vmatpush1.xpose.msra.mxu0 0.0
    %911 = vmatprep.subr.mxu0 0.0
    %912 = vmatpush1.xpose.msra.mxu0 0.0
    %913 = vmatprep.subr.mxu0 0.0
    %914 = vmatpush1.xpose.msra.mxu0 %v881
    %915 = vmatprep.subr.mxu0 0.0
    %916 = vmatpush2.xpose.msra.mxu0 0.0
    %917 = vmatprep.subr.mxu0 0.0
    %918 = vmatpush2.xpose.msra.mxu0 0.0
    %919 = vmatprep.subr.mxu0 0.0
    %920 = vmatpush2.xpose.msra.mxu0 0.0
    %921 = vmatprep.subr.mxu0 0.0
    %922 = vmatpush2.xpose.msra.mxu0 0.0
    %923 = vmatprep.subr.mxu0 0.0
    %924 = vmatpush2.xpose.msra.mxu0 0.0
    %925 = vmatprep.subr.mxu0 0.0
    %926 = vmatpush2.xpose.msra.mxu0 0.0
    %927 = vmatprep.subr.mxu0 0.0
    %928 = vmatpush2.xpose.msra.mxu0 0.0
    %929 = vmatprep.subr.mxu0 0.0
    %930 = vmatpush2.xpose.msra.mxu0 0.0
    %931 = vmatprep.subr.mxu0 0.0
    %932 = vmatpush2.xpose.msra.mxu0 0.0
    %933 = vmatprep.subr.mxu0 0.0
    %934 = vmatpush2.xpose.msra.mxu0 0.0
    %935 = vmatprep.subr.mxu0 0.0
    %936 = vmatpush2.xpose.msra.mxu0 0.0
    %937 = vmatprep.subr.mxu0 0.0
    %938 = vmatpush2.xpose.msra.mxu0 0.0
    %939 = vmatprep.subr.mxu0 0.0
    %940 = vmatpush2.xpose.msra.mxu0 0.0
    %941 = vmatprep.subr.mxu0 0.0
    %942 = vmatpush2.xpose.msra.mxu0 0.0
    %943 = vmatprep.subr.mxu0 0.0
    %944 = vmatpush2.xpose.msra.mxu0 0.0
    %945 = vmatprep.subr.mxu0 0.0
    %946 = vmatpush2.xpose.msra.mxu0 0.0
    %947 = vmatprep.mubr.f32.mxu0 0.0
    %948 = vmatmul.mubr.f32.gmra.mxu0 %v879
    %v949 = vpop.f32.mrf.mxu0
    %v950 = vadd.f32 0.0, %v949
    %v951 = vpop.f32.mrf.mxu0
    %952 = vdwg.mxu0
    %954 = vrot.lane.b32.xlu0 %v731, 120
    %v955 = vpop.permute.xlu0 %954
    %957 = vrot.lane.b32.xlu0 %v771, 88
    %v958 = vpop.permute.xlu0 %957
    %v959 = vsel %vm221, %v955, 0
    %v961 = vsel %vm221, %v958, 0
    %963 = vmatprep.subr.mxu0 0.0
    %964 = vmatpush1.xpose.msra.mxu0 0.0
    %965 = vmatprep.subr.mxu0 0.0
    %966 = vmatpush1.xpose.msra.mxu0 0.0
    %967 = vmatprep.subr.mxu0 0.0
    %968 = vmatpush1.xpose.msra.mxu0 0.0
    %969 = vmatprep.subr.mxu0 0.0
    %970 = vmatpush1.xpose.msra.mxu0 0.0
    %971 = vmatprep.subr.mxu0 0.0
    %972 = vmatpush1.xpose.msra.mxu0 0.0
    %973 = vmatprep.subr.mxu0 0.0
    %974 = vmatpush1.xpose.msra.mxu0 0.0
    %975 = vmatprep.subr.mxu0 0.0
    %976 = vmatpush1.xpose.msra.mxu0 0.0
    %977 = vmatprep.subr.mxu0 0.0
    %978 = vmatpush1.xpose.msra.mxu0 0.0
    %979 = vmatprep.subr.mxu0 0.0
    %980 = vmatpush1.xpose.msra.mxu0 0.0
    %981 = vmatprep.subr.mxu0 0.0
    %982 = vmatpush1.xpose.msra.mxu0 0.0
    %983 = vmatprep.subr.mxu0 0.0
    %984 = vmatpush1.xpose.msra.mxu0 0.0
    %985 = vmatprep.subr.mxu0 0.0
    %986 = vmatpush1.xpose.msra.mxu0 0.0
    %987 = vmatprep.subr.mxu0 0.0
    %988 = vmatpush1.xpose.msra.mxu0 0.0
    %989 = vmatprep.subr.mxu0 0.0
    %990 = vmatpush1.xpose.msra.mxu0 0.0
    %991 = vmatprep.subr.mxu0 0.0
    %992 = vmatpush1.xpose.msra.mxu0 0.0
    %993 = vmatprep.subr.mxu0 0.0
    %994 = vmatpush1.xpose.msra.mxu0 %v961
    %995 = vmatprep.subr.mxu0 0.0
    %996 = vmatpush2.xpose.msra.mxu0 0.0
    %997 = vmatprep.subr.mxu0 0.0
    %998 = vmatpush2.xpose.msra.mxu0 0.0
    %999 = vmatprep.subr.mxu0 0.0
    %1000 = vmatpush2.xpose.msra.mxu0 0.0
    %1001 = vmatprep.subr.mxu0 0.0
    %1002 = vmatpush2.xpose.msra.mxu0 0.0
    %1003 = vmatprep.subr.mxu0 0.0
    %1004 = vmatpush2.xpose.msra.mxu0 0.0
    %1005 = vmatprep.subr.mxu0 0.0
    %1006 = vmatpush2.xpose.msra.mxu0 0.0
    %1007 = vmatprep.subr.mxu0 0.0
    %1008 = vmatpush2.xpose.msra.mxu0 0.0
    %1009 = vmatprep.subr.mxu0 0.0
    %1010 = vmatpush2.xpose.msra.mxu0 0.0
    %1011 = vmatprep.subr.mxu0 0.0
    %1012 = vmatpush2.xpose.msra.mxu0 0.0
    %1013 = vmatprep.subr.mxu0 0.0
    %1014 = vmatpush2.xpose.msra.mxu0 0.0
    %1015 = vmatprep.subr.mxu0 0.0
    %1016 = vmatpush2.xpose.msra.mxu0 0.0
    %1017 = vmatprep.subr.mxu0 0.0
    %1018 = vmatpush2.xpose.msra.mxu0 0.0
    %1019 = vmatprep.subr.mxu0 0.0
    %1020 = vmatpush2.xpose.msra.mxu0 0.0
    %1021 = vmatprep.subr.mxu0 0.0
    %1022 = vmatpush2.xpose.msra.mxu0 0.0
    %1023 = vmatprep.subr.mxu0 0.0
    %1024 = vmatpush2.xpose.msra.mxu0 0.0
    %1025 = vmatprep.subr.mxu0 0.0
    %1026 = vmatpush2.xpose.msra.mxu0 0.0
    %1027 = vmatprep.mubr.f32.mxu0 0.0
    %1028 = vmatmul.mubr.f32.gmra.mxu0 %v959
    %v1029 = vpop.f32.mrf.mxu0
    %v1030 = vadd.f32 %v870, %v1029
    %v1031 = vpop.f32.mrf.mxu0
    %1032 = vdwg.mxu0
    %1034 = vrot.lane.b32.xlu0 %v732, 120
    %v1035 = vpop.permute.xlu0 %1034
    %1037 = vrot.lane.b32.xlu0 %v772, 88
    %v1038 = vpop.permute.xlu0 %1037
    %v1039 = vsel %vm221, %v1035, 0
    %v1041 = vsel %vm221, %v1038, 0
    %1043 = vmatprep.subr.mxu0 0.0
    %1044 = vmatpush1.xpose.msra.mxu0 0.0
    %1045 = vmatprep.subr.mxu0 0.0
    %1046 = vmatpush1.xpose.msra.mxu0 0.0
    %1047 = vmatprep.subr.mxu0 0.0
    %1048 = vmatpush1.xpose.msra.mxu0 0.0
    %1049 = vmatprep.subr.mxu0 0.0
    %1050 = vmatpush1.xpose.msra.mxu0 0.0
    %1051 = vmatprep.subr.mxu0 0.0
    %1052 = vmatpush1.xpose.msra.mxu0 0.0
    %1053 = vmatprep.subr.mxu0 0.0
    %1054 = vmatpush1.xpose.msra.mxu0 0.0
    %1055 = vmatprep.subr.mxu0 0.0
    %1056 = vmatpush1.xpose.msra.mxu0 0.0
    %1057 = vmatprep.subr.mxu0 0.0
    %1058 = vmatpush1.xpose.msra.mxu0 0.0
    %1059 = vmatprep.subr.mxu0 0.0
    %1060 = vmatpush1.xpose.msra.mxu0 0.0
    %1061 = vmatprep.subr.mxu0 0.0
    %1062 = vmatpush1.xpose.msra.mxu0 0.0
    %1063 = vmatprep.subr.mxu0 0.0
    %1064 = vmatpush1.xpose.msra.mxu0 0.0
    %1065 = vmatprep.subr.mxu0 0.0
    %1066 = vmatpush1.xpose.msra.mxu0 0.0
    %1067 = vmatprep.subr.mxu0 0.0
    %1068 = vmatpush1.xpose.msra.mxu0 0.0
    %1069 = vmatprep.subr.mxu0 0.0
    %1070 = vmatpush1.xpose.msra.mxu0 0.0
    %1071 = vmatprep.subr.mxu0 0.0
    %1072 = vmatpush1.xpose.msra.mxu0 0.0
    %1073 = vmatprep.subr.mxu0 0.0
    %1074 = vmatpush1.xpose.msra.mxu0 %v1041
    %1075 = vmatprep.subr.mxu0 0.0
    %1076 = vmatpush2.xpose.msra.mxu0 0.0
    %1077 = vmatprep.subr.mxu0 0.0
    %1078 = vmatpush2.xpose.msra.mxu0 0.0
    %1079 = vmatprep.subr.mxu0 0.0
    %1080 = vmatpush2.xpose.msra.mxu0 0.0
    %1081 = vmatprep.subr.mxu0 0.0
    %1082 = vmatpush2.xpose.msra.mxu0 0.0
    %1083 = vmatprep.subr.mxu0 0.0
    %1084 = vmatpush2.xpose.msra.mxu0 0.0
    %1085 = vmatprep.subr.mxu0 0.0
    %1086 = vmatpush2.xpose.msra.mxu0 0.0
    %1087 = vmatprep.subr.mxu0 0.0
    %1088 = vmatpush2.xpose.msra.mxu0 0.0
    %1089 = vmatprep.subr.mxu0 0.0
    %1090 = vmatpush2.xpose.msra.mxu0 0.0
    %1091 = vmatprep.subr.mxu0 0.0
    %1092 = vmatpush2.xpose.msra.mxu0 0.0
    %1093 = vmatprep.subr.mxu0 0.0
    %1094 = vmatpush2.xpose.msra.mxu0 0.0
    %1095 = vmatprep.subr.mxu0 0.0
    %1096 = vmatpush2.xpose.msra.mxu0 0.0
    %1097 = vmatprep.subr.mxu0 0.0
    %1098 = vmatpush2.xpose.msra.mxu0 0.0
    %1099 = vmatprep.subr.mxu0 0.0
    %1100 = vmatpush2.xpose.msra.mxu0 0.0
    %1101 = vmatprep.subr.mxu0 0.0
    %1102 = vmatpush2.xpose.msra.mxu0 0.0
    %1103 = vmatprep.subr.mxu0 0.0
    %1104 = vmatpush2.xpose.msra.mxu0 0.0
    %1105 = vmatprep.subr.mxu0 0.0
    %1106 = vmatpush2.xpose.msra.mxu0 0.0
    %1107 = vmatprep.mubr.f32.mxu0 0.0
    %1108 = vmatmul.mubr.f32.gmra.mxu0 %v1039
    %v1109 = vpop.f32.mrf.mxu0
    %v1110 = vadd.f32 %v950, %v1109
    %v1111 = vpop.f32.mrf.mxu0
    %1112 = vdwg.mxu0
    %v1113 = vsel %vm533, %v1030, -1e+30
    %v1114 = vsel %vm533, %v1110, -1e+30
    %v1115 = vsel %vm536, %v1113, -inf
    %1116 = vmax.xlane.f32.xlu0 %v1115
    %v1117 = vpop.xlane.xlu0 %1116
    %v1118 = vsel %vm536, %v1114, -inf
    %1119 = vmax.xlane.f32.xlu0 %v1118
    %v1120 = vpop.xlane.xlu0 %1119
    %v1121 = vsub.f32 %v1113, %v1117
    %v1122 = vsub.f32 %v1114, %v1120
    %v1123 = vmul.f32 %v1121, 1.442695
    %v1124 = vpow.pop %v1123
    %v1125 = vmul.f32 %v1122, 1.442695
    %v1126 = vpow.pop %v1125
    %v1127 = vsel %vm536, %v1124, 0.0
    %1128 = vadd.xlane.f32.xlu0 %v1127
    %v1129 = vpop.xlane.xlu0 %1128
    %v1130 = vsel %vm536, %v1126, 0.0
    %1131 = vadd.xlane.f32.xlu0 %v1130
    %v1132 = vpop.xlane.xlu0 %1131
    %1133 = vrot.lane.b32.xlu0 %v124, 56
    %v1134 = vpop.permute.xlu0 %1133
    %v1137 = vsel %vm536, %v1124, 0
    %1139 = vmatprep.subr.mxu0 0.0
    %1140 = vmatpush1.msra.mxu0 0.0
    %1141 = vmatprep.subr.mxu0 0.0
    %1142 = vmatpush1.msra.mxu0 0.0
    %1143 = vmatprep.subr.mxu0 0.0
    %1144 = vmatpush1.msra.mxu0 0.0
    %1145 = vmatprep.subr.mxu0 0.0
    %1146 = vmatpush1.msra.mxu0 0.0
    %1147 = vmatprep.subr.mxu0 0.0
    %1148 = vmatpush1.msra.mxu0 0.0
    %1149 = vmatprep.subr.mxu0 0.0
    %1150 = vmatpush1.msra.mxu0 0.0
    %1151 = vmatprep.subr.mxu0 0.0
    %1152 = vmatpush1.msra.mxu0 0.0
    %1153 = vmatprep.subr.mxu0 0.0
    %1154 = vmatpush1.msra.mxu0 0.0
    %1155 = vmatprep.subr.mxu0 0.0
    %1156 = vmatpush1.msra.mxu0 0.0
    %1157 = vmatprep.subr.mxu0 0.0
    %1158 = vmatpush1.msra.mxu0 0.0
    %1159 = vmatprep.subr.mxu0 0.0
    %1160 = vmatpush1.msra.mxu0 0.0
    %1161 = vmatprep.subr.mxu0 0.0
    %1162 = vmatpush1.msra.mxu0 0.0
    %1163 = vmatprep.subr.mxu0 0.0
    %1164 = vmatpush1.msra.mxu0 0.0
    %1165 = vmatprep.subr.mxu0 0.0
    %1166 = vmatpush1.msra.mxu0 0.0
    %1167 = vmatprep.subr.mxu0 0.0
    %1168 = vmatpush1.msra.mxu0 0.0
    %1169 = vmatprep.subr.mxu0 0.0
    %1170 = vmatpush1.msra.mxu0 %v1134
    %1171 = vmatprep.subr.mxu0 0.0
    %1172 = vmatpush2.msra.mxu0 0.0
    %1173 = vmatprep.subr.mxu0 0.0
    %1174 = vmatpush2.msra.mxu0 0.0
    %1175 = vmatprep.subr.mxu0 0.0
    %1176 = vmatpush2.msra.mxu0 0.0
    %1177 = vmatprep.subr.mxu0 0.0
    %1178 = vmatpush2.msra.mxu0 0.0
    %1179 = vmatprep.subr.mxu0 0.0
    %1180 = vmatpush2.msra.mxu0 0.0
    %1181 = vmatprep.subr.mxu0 0.0
    %1182 = vmatpush2.msra.mxu0 0.0
    %1183 = vmatprep.subr.mxu0 0.0
    %1184 = vmatpush2.msra.mxu0 0.0
    %1185 = vmatprep.subr.mxu0 0.0
    %1186 = vmatpush2.msra.mxu0 0.0
    %1187 = vmatprep.subr.mxu0 0.0
    %1188 = vmatpush2.msra.mxu0 0.0
    %1189 = vmatprep.subr.mxu0 0.0
    %1190 = vmatpush2.msra.mxu0 0.0
    %1191 = vmatprep.subr.mxu0 0.0
    %1192 = vmatpush2.msra.mxu0 0.0
    %1193 = vmatprep.subr.mxu0 0.0
    %1194 = vmatpush2.msra.mxu0 0.0
    %1195 = vmatprep.subr.mxu0 0.0
    %1196 = vmatpush2.msra.mxu0 0.0
    %1197 = vmatprep.subr.mxu0 0.0
    %1198 = vmatpush2.msra.mxu0 0.0
    %1199 = vmatprep.subr.mxu0 0.0
    %1200 = vmatpush2.msra.mxu0 0.0
    %1201 = vmatprep.subr.mxu0 0.0
    %1202 = vmatpush2.msra.mxu0 0.0
    %1203 = vmatprep.mubr.f32.mxu0 0.0
    %1204 = vmatmul.mubr.f32.gmra.mxu0 %v1137
    %v1205 = vpop.f32.mrf.mxu0
    %v1206 = vadd.f32 0.0, %v1205
    %v1207 = vpop.f32.mrf.mxu0
    %1208 = vdwg.mxu0
    %1209 = vrot.lane.b32.xlu0 %v129, 56
    %v1210 = vpop.permute.xlu0 %1209
    %v1213 = vsel %vm536, %v1126, 0
    %1215 = vmatprep.subr.mxu0 0.0
    %1216 = vmatpush1.msra.mxu0 0.0
    %1217 = vmatprep.subr.mxu0 0.0
    %1218 = vmatpush1.msra.mxu0 0.0
    %1219 = vmatprep.subr.mxu0 0.0
    %1220 = vmatpush1.msra.mxu0 0.0
    %1221 = vmatprep.subr.mxu0 0.0
    %1222 = vmatpush1.msra.mxu0 0.0
    %1223 = vmatprep.subr.mxu0 0.0
    %1224 = vmatpush1.msra.mxu0 0.0
    %1225 = vmatprep.subr.mxu0 0.0
    %1226 = vmatpush1.msra.mxu0 0.0
    %1227 = vmatprep.subr.mxu0 0.0
    %1228 = vmatpush1.msra.mxu0 0.0
    %1229 = vmatprep.subr.mxu0 0.0
    %1230 = vmatpush1.msra.mxu0 0.0
    %1231 = vmatprep.subr.mxu0 0.0
    %1232 = vmatpush1.msra.mxu0 0.0
    %1233 = vmatprep.subr.mxu0 0.0
    %1234 = vmatpush1.msra.mxu0 0.0
    %1235 = vmatprep.subr.mxu0 0.0
    %1236 = vmatpush1.msra.mxu0 0.0
    %1237 = vmatprep.subr.mxu0 0.0
    %1238 = vmatpush1.msra.mxu0 0.0
    %1239 = vmatprep.subr.mxu0 0.0
    %1240 = vmatpush1.msra.mxu0 0.0
    %1241 = vmatprep.subr.mxu0 0.0
    %1242 = vmatpush1.msra.mxu0 0.0
    %1243 = vmatprep.subr.mxu0 0.0
    %1244 = vmatpush1.msra.mxu0 0.0
    %1245 = vmatprep.subr.mxu0 0.0
    %1246 = vmatpush1.msra.mxu0 %v1210
    %1247 = vmatprep.subr.mxu0 0.0
    %1248 = vmatpush2.msra.mxu0 0.0
    %1249 = vmatprep.subr.mxu0 0.0
    %1250 = vmatpush2.msra.mxu0 0.0
    %1251 = vmatprep.subr.mxu0 0.0
    %1252 = vmatpush2.msra.mxu0 0.0
    %1253 = vmatprep.subr.mxu0 0.0
    %1254 = vmatpush2.msra.mxu0 0.0
    %1255 = vmatprep.subr.mxu0 0.0
    %1256 = vmatpush2.msra.mxu0 0.0
    %1257 = vmatprep.subr.mxu0 0.0
    %1258 = vmatpush2.msra.mxu0 0.0
    %1259 = vmatprep.subr.mxu0 0.0
    %1260 = vmatpush2.msra.mxu0 0.0
    %1261 = vmatprep.subr.mxu0 0.0
    %1262 = vmatpush2.msra.mxu0 0.0
    %1263 = vmatprep.subr.mxu0 0.0
    %1264 = vmatpush2.msra.mxu0 0.0
    %1265 = vmatprep.subr.mxu0 0.0
    %1266 = vmatpush2.msra.mxu0 0.0
    %1267 = vmatprep.subr.mxu0 0.0
    %1268 = vmatpush2.msra.mxu0 0.0
    %1269 = vmatprep.subr.mxu0 0.0
    %1270 = vmatpush2.msra.mxu0 0.0
    %1271 = vmatprep.subr.mxu0 0.0
    %1272 = vmatpush2.msra.mxu0 0.0
    %1273 = vmatprep.subr.mxu0 0.0
    %1274 = vmatpush2.msra.mxu0 0.0
    %1275 = vmatprep.subr.mxu0 0.0
    %1276 = vmatpush2.msra.mxu0 0.0
    %1277 = vmatprep.subr.mxu0 0.0
    %1278 = vmatpush2.msra.mxu0 0.0
    %1279 = vmatprep.mubr.f32.mxu0 0.0
    %1280 = vmatmul.mubr.f32.gmra.mxu0 %v1213
    %v1281 = vpop.f32.mrf.mxu0
    %v1282 = vadd.f32 0.0, %v1281
    %v1283 = vpop.f32.mrf.mxu0
    %1284 = vdwg.mxu0
    %v1285 = vrcp.pop %v1129
    %v1286 = vrcp.pop %v1132
    %v1287 = vmul.f32 %v1206, %v1285
    %v1288 = vmul.f32 %v1282, %v1286
    %1289 = vrot.lane.b32.xlu0 %v132, 16
    %v1290 = vpop.permute.xlu0 %1289
    %v1292 = vmul.f32 %v124, %v1290
    %v1293 = vmul.f32 %v129, %v1290
    %1294 = vrot.lane.b32.xlu0 %v133, 20
    %v1295 = vpop.permute.xlu0 %1294
    %v1297 = vmul.f32 %v124, %v1295
    %v1298 = vmul.f32 %v129, %v1295
    %1301 = vrot.lane.b32.xlu0 %v1297, 124
    %v1302 = vpop.permute.xlu0 %1301
    %1303 = vrot.lane.b32.xlu0 %v1298, 124
    %v1304 = vpop.permute.xlu0 %1303
    %v1307 = vadd.f32 %v1292, %v1302
    %v1308 = vadd.f32 %v1293, %v1304
    %1309 = vrot.lane.b32.xlu0 %v132, 20
    %v1310 = vpop.permute.xlu0 %1309
    %v1312 = vmul.f32 %v124, %v1310
    %v1313 = vmul.f32 %v129, %v1310
    %1314 = vrot.lane.b32.xlu0 %v133, 16
    %v1315 = vpop.permute.xlu0 %1314
    %v1317 = vmul.f32 %v124, %v1315
    %v1318 = vmul.f32 %v129, %v1315
    %1321 = vrot.lane.b32.xlu0 %v1317, 4
    %v1322 = vpop.permute.xlu0 %1321
    %1323 = vrot.lane.b32.xlu0 %v1318, 4
    %v1324 = vpop.permute.xlu0 %1323
    %v1327 = vsub.f32 %v1312, %v1322
    %v1328 = vsub.f32 %v1313, %v1324
    %1329 = vrot.lane.b32.xlu0 %v132, 48
    %v1330 = vpop.permute.xlu0 %1329
    %v1332 = vmul.f32 %v124, %v1330
    %v1333 = vmul.f32 %v129, %v1330
    %1334 = vrot.lane.b32.xlu0 %v133, 52
    %v1335 = vpop.permute.xlu0 %1334
    %v1337 = vmul.f32 %v124, %v1335
    %v1338 = vmul.f32 %v129, %v1335
    %1341 = vrot.lane.b32.xlu0 %v1337, 124
    %v1342 = vpop.permute.xlu0 %1341
    %1343 = vrot.lane.b32.xlu0 %v1338, 124
    %v1344 = vpop.permute.xlu0 %1343
    %v1347 = vadd.f32 %v1332, %v1342
    %v1348 = vadd.f32 %v1333, %v1344
    %1349 = vrot.lane.b32.xlu0 %v132, 52
    %v1350 = vpop.permute.xlu0 %1349
    %v1352 = vmul.f32 %v124, %v1350
    %v1353 = vmul.f32 %v129, %v1350
    %1354 = vrot.lane.b32.xlu0 %v133, 48
    %v1355 = vpop.permute.xlu0 %1354
    %v1357 = vmul.f32 %v124, %v1355
    %v1358 = vmul.f32 %v129, %v1355
    %1361 = vrot.lane.b32.xlu0 %v1357, 4
    %v1362 = vpop.permute.xlu0 %1361
    %1363 = vrot.lane.b32.xlu0 %v1358, 4
    %v1364 = vpop.permute.xlu0 %1363
    %v1367 = vsub.f32 %v1352, %v1362
    %v1368 = vsub.f32 %v1353, %v1364
    %1370 = vrot.lane.b32.xlu0 %v1327, 108
    %v1371 = vpop.permute.xlu0 %1370
    %1373 = vrot.lane.b32.xlu0 %v1367, 76
    %v1374 = vpop.permute.xlu0 %1373
    %v1375 = vsel %vm221, %v1371, 0
    %v1377 = vsel %vm221, %v1374, 0
    %1379 = vmatprep.subr.mxu0 0.0
    %1380 = vmatpush1.xpose.msra.mxu0 0.0
    %1381 = vmatprep.subr.mxu0 0.0
    %1382 = vmatpush1.xpose.msra.mxu0 0.0
    %1383 = vmatprep.subr.mxu0 0.0
    %1384 = vmatpush1.xpose.msra.mxu0 0.0
    %1385 = vmatprep.subr.mxu0 0.0
    %1386 = vmatpush1.xpose.msra.mxu0 0.0
    %1387 = vmatprep.subr.mxu0 0.0
    %1388 = vmatpush1.xpose.msra.mxu0 0.0
    %1389 = vmatprep.subr.mxu0 0.0
    %1390 = vmatpush1.xpose.msra.mxu0 0.0
    %1391 = vmatprep.subr.mxu0 0.0
    %1392 = vmatpush1.xpose.msra.mxu0 0.0
    %1393 = vmatprep.subr.mxu0 0.0
    %1394 = vmatpush1.xpose.msra.mxu0 0.0
    %1395 = vmatprep.subr.mxu0 0.0
    %1396 = vmatpush1.xpose.msra.mxu0 0.0
    %1397 = vmatprep.subr.mxu0 0.0
    %1398 = vmatpush1.xpose.msra.mxu0 0.0
    %1399 = vmatprep.subr.mxu0 0.0
    %1400 = vmatpush1.xpose.msra.mxu0 0.0
    %1401 = vmatprep.subr.mxu0 0.0
    %1402 = vmatpush1.xpose.msra.mxu0 0.0
    %1403 = vmatprep.subr.mxu0 0.0
    %1404 = vmatpush1.xpose.msra.mxu0 0.0
    %1405 = vmatprep.subr.mxu0 0.0
    %1406 = vmatpush1.xpose.msra.mxu0 0.0
    %1407 = vmatprep.subr.mxu0 0.0
    %1408 = vmatpush1.xpose.msra.mxu0 0.0
    %1409 = vmatprep.subr.mxu0 0.0
    %1410 = vmatpush1.xpose.msra.mxu0 %v1377
    %1411 = vmatprep.subr.mxu0 0.0
    %1412 = vmatpush2.xpose.msra.mxu0 0.0
    %1413 = vmatprep.subr.mxu0 0.0
    %1414 = vmatpush2.xpose.msra.mxu0 0.0
    %1415 = vmatprep.subr.mxu0 0.0
    %1416 = vmatpush2.xpose.msra.mxu0 0.0
    %1417 = vmatprep.subr.mxu0 0.0
    %1418 = vmatpush2.xpose.msra.mxu0 0.0
    %1419 = vmatprep.subr.mxu0 0.0
    %1420 = vmatpush2.xpose.msra.mxu0 0.0
    %1421 = vmatprep.subr.mxu0 0.0
    %1422 = vmatpush2.xpose.msra.mxu0 0.0
    %1423 = vmatprep.subr.mxu0 0.0
    %1424 = vmatpush2.xpose.msra.mxu0 0.0
    %1425 = vmatprep.subr.mxu0 0.0
    %1426 = vmatpush2.xpose.msra.mxu0 0.0
    %1427 = vmatprep.subr.mxu0 0.0
    %1428 = vmatpush2.xpose.msra.mxu0 0.0
    %1429 = vmatprep.subr.mxu0 0.0
    %1430 = vmatpush2.xpose.msra.mxu0 0.0
    %1431 = vmatprep.subr.mxu0 0.0
    %1432 = vmatpush2.xpose.msra.mxu0 0.0
    %1433 = vmatprep.subr.mxu0 0.0
    %1434 = vmatpush2.xpose.msra.mxu0 0.0
    %1435 = vmatprep.subr.mxu0 0.0
    %1436 = vmatpush2.xpose.msra.mxu0 0.0
    %1437 = vmatprep.subr.mxu0 0.0
    %1438 = vmatpush2.xpose.msra.mxu0 0.0
    %1439 = vmatprep.subr.mxu0 0.0
    %1440 = vmatpush2.xpose.msra.mxu0 0.0
    %1441 = vmatprep.subr.mxu0 0.0
    %1442 = vmatpush2.xpose.msra.mxu0 0.0
    %1443 = vmatprep.mubr.f32.mxu0 0.0
    %1444 = vmatmul.mubr.f32.gmra.mxu0 %v1375
    %v1445 = vpop.f32.mrf.mxu0
    %v1446 = vadd.f32 0.0, %v1445
    %v1447 = vpop.f32.mrf.mxu0
    %1448 = vdwg.mxu0
    %1450 = vrot.lane.b32.xlu0 %v1328, 108
    %v1451 = vpop.permute.xlu0 %1450
    %1453 = vrot.lane.b32.xlu0 %v1368, 76
    %v1454 = vpop.permute.xlu0 %1453
    %v1455 = vsel %vm221, %v1451, 0
    %v1457 = vsel %vm221, %v1454, 0
    %1459 = vmatprep.subr.mxu0 0.0
    %1460 = vmatpush1.xpose.msra.mxu0 0.0
    %1461 = vmatprep.subr.mxu0 0.0
    %1462 = vmatpush1.xpose.msra.mxu0 0.0
    %1463 = vmatprep.subr.mxu0 0.0
    %1464 = vmatpush1.xpose.msra.mxu0 0.0
    %1465 = vmatprep.subr.mxu0 0.0
    %1466 = vmatpush1.xpose.msra.mxu0 0.0
    %1467 = vmatprep.subr.mxu0 0.0
    %1468 = vmatpush1.xpose.msra.mxu0 0.0
    %1469 = vmatprep.subr.mxu0 0.0
    %1470 = vmatpush1.xpose.msra.mxu0 0.0
    %1471 = vmatprep.subr.mxu0 0.0
    %1472 = vmatpush1.xpose.msra.mxu0 0.0
    %1473 = vmatprep.subr.mxu0 0.0
    %1474 = vmatpush1.xpose.msra.mxu0 0.0
    %1475 = vmatprep.subr.mxu0 0.0
    %1476 = vmatpush1.xpose.msra.mxu0 0.0
    %1477 = vmatprep.subr.mxu0 0.0
    %1478 = vmatpush1.xpose.msra.mxu0 0.0
    %1479 = vmatprep.subr.mxu0 0.0
    %1480 = vmatpush1.xpose.msra.mxu0 0.0
    %1481 = vmatprep.subr.mxu0 0.0
    %1482 = vmatpush1.xpose.msra.mxu0 0.0
    %1483 = vmatprep.subr.mxu0 0.0
    %1484 = vmatpush1.xpose.msra.mxu0 0.0
    %1485 = vmatprep.subr.mxu0 0.0
    %1486 = vmatpush1.xpose.msra.mxu0 0.0
    %1487 = vmatprep.subr.mxu0 0.0
    %1488 = vmatpush1.xpose.msra.mxu0 0.0
    %1489 = vmatprep.subr.mxu0 0.0
    %1490 = vmatpush1.xpose.msra.mxu0 %v1457
    %1491 = vmatprep.subr.mxu0 0.0
    %1492 = vmatpush2.xpose.msra.mxu0 0.0
    %1493 = vmatprep.subr.mxu0 0.0
    %1494 = vmatpush2.xpose.msra.mxu0 0.0
    %1495 = vmatprep.subr.mxu0 0.0
    %1496 = vmatpush2.xpose.msra.mxu0 0.0
    %1497 = vmatprep.subr.mxu0 0.0
    %1498 = vmatpush2.xpose.msra.mxu0 0.0
    %1499 = vmatprep.subr.mxu0 0.0
    %1500 = vmatpush2.xpose.msra.mxu0 0.0
    %1501 = vmatprep.subr.mxu0 0.0
    %1502 = vmatpush2.xpose.msra.mxu0 0.0
    %1503 = vmatprep.subr.mxu0 0.0
    %1504 = vmatpush2.xpose.msra.mxu0 0.0
    %1505 = vmatprep.subr.mxu0 0.0
    %1506 = vmatpush2.xpose.msra.mxu0 0.0
    %1507 = vmatprep.subr.mxu0 0.0
    %1508 = vmatpush2.xpose.msra.mxu0 0.0
    %1509 = vmatprep.subr.mxu0 0.0
    %1510 = vmatpush2.xpose.msra.mxu0 0.0
    %1511 = vmatprep.subr.mxu0 0.0
    %1512 = vmatpush2.xpose.msra.mxu0 0.0
    %1513 = vmatprep.subr.mxu0 0.0
    %1514 = vmatpush2.xpose.msra.mxu0 0.0
    %1515 = vmatprep.subr.mxu0 0.0
    %1516 = vmatpush2.xpose.msra.mxu0 0.0
    %1517 = vmatprep.subr.mxu0 0.0
    %1518 = vmatpush2.xpose.msra.mxu0 0.0
    %1519 = vmatprep.subr.mxu0 0.0
    %1520 = vmatpush2.xpose.msra.mxu0 0.0
    %1521 = vmatprep.subr.mxu0 0.0
    %1522 = vmatpush2.xpose.msra.mxu0 0.0
    %1523 = vmatprep.mubr.f32.mxu0 0.0
    %1524 = vmatmul.mubr.f32.gmra.mxu0 %v1455
    %v1525 = vpop.f32.mrf.mxu0
    %v1526 = vadd.f32 0.0, %v1525
    %v1527 = vpop.f32.mrf.mxu0
    %1528 = vdwg.mxu0
    %1530 = vrot.lane.b32.xlu0 %v1307, 112
    %v1531 = vpop.permute.xlu0 %1530
    %1533 = vrot.lane.b32.xlu0 %v1347, 80
    %v1534 = vpop.permute.xlu0 %1533
    %v1535 = vsel %vm221, %v1531, 0
    %v1537 = vsel %vm221, %v1534, 0
    %1539 = vmatprep.subr.mxu0 0.0
    %1540 = vmatpush1.xpose.msra.mxu0 0.0
    %1541 = vmatprep.subr.mxu0 0.0
    %1542 = vmatpush1.xpose.msra.mxu0 0.0
    %1543 = vmatprep.subr.mxu0 0.0
    %1544 = vmatpush1.xpose.msra.mxu0 0.0
    %1545 = vmatprep.subr.mxu0 0.0
    %1546 = vmatpush1.xpose.msra.mxu0 0.0
    %1547 = vmatprep.subr.mxu0 0.0
    %1548 = vmatpush1.xpose.msra.mxu0 0.0
    %1549 = vmatprep.subr.mxu0 0.0
    %1550 = vmatpush1.xpose.msra.mxu0 0.0
    %1551 = vmatprep.subr.mxu0 0.0
    %1552 = vmatpush1.xpose.msra.mxu0 0.0
    %1553 = vmatprep.subr.mxu0 0.0
    %1554 = vmatpush1.xpose.msra.mxu0 0.0
    %1555 = vmatprep.subr.mxu0 0.0
    %1556 = vmatpush1.xpose.msra.mxu0 0.0
    %1557 = vmatprep.subr.mxu0 0.0
    %1558 = vmatpush1.xpose.msra.mxu0 0.0
    %1559 = vmatprep.subr.mxu0 0.0
    %1560 = vmatpush1.xpose.msra.mxu0 0.0
    %1561 = vmatprep.subr.mxu0 0.0
    %1562 = vmatpush1.xpose.msra.mxu0 0.0
    %1563 = vmatprep.subr.mxu0 0.0
    %1564 = vmatpush1.xpose.msra.mxu0 0.0
    %1565 = vmatprep.subr.mxu0 0.0
    %1566 = vmatpush1.xpose.msra.mxu0 0.0
    %1567 = vmatprep.subr.mxu0 0.0
    %1568 = vmatpush1.xpose.msra.mxu0 0.0
    %1569 = vmatprep.subr.mxu0 0.0
    %1570 = vmatpush1.xpose.msra.mxu0 %v1537
    %1571 = vmatprep.subr.mxu0 0.0
    %1572 = vmatpush2.xpose.msra.mxu0 0.0
    %1573 = vmatprep.subr.mxu0 0.0
    %1574 = vmatpush2.xpose.msra.mxu0 0.0
    %1575 = vmatprep.subr.mxu0 0.0
    %1576 = vmatpush2.xpose.msra.mxu0 0.0
    %1577 = vmatprep.subr.mxu0 0.0
    %1578 = vmatpush2.xpose.msra.mxu0 0.0
    %1579 = vmatprep.subr.mxu0 0.0
    %1580 = vmatpush2.xpose.msra.mxu0 0.0
    %1581 = vmatprep.subr.mxu0 0.0
    %1582 = vmatpush2.xpose.msra.mxu0 0.0
    %1583 = vmatprep.subr.mxu0 0.0
    %1584 = vmatpush2.xpose.msra.mxu0 0.0
    %1585 = vmatprep.subr.mxu0 0.0
    %1586 = vmatpush2.xpose.msra.mxu0 0.0
    %1587 = vmatprep.subr.mxu0 0.0
    %1588 = vmatpush2.xpose.msra.mxu0 0.0
    %1589 = vmatprep.subr.mxu0 0.0
    %1590 = vmatpush2.xpose.msra.mxu0 0.0
    %1591 = vmatprep.subr.mxu0 0.0
    %1592 = vmatpush2.xpose.msra.mxu0 0.0
    %1593 = vmatprep.subr.mxu0 0.0
    %1594 = vmatpush2.xpose.msra.mxu0 0.0
    %1595 = vmatprep.subr.mxu0 0.0
    %1596 = vmatpush2.xpose.msra.mxu0 0.0
    %1597 = vmatprep.subr.mxu0 0.0
    %1598 = vmatpush2.xpose.msra.mxu0 0.0
    %1599 = vmatprep.subr.mxu0 0.0
    %1600 = vmatpush2.xpose.msra.mxu0 0.0
    %1601 = vmatprep.subr.mxu0 0.0
    %1602 = vmatpush2.xpose.msra.mxu0 0.0
    %1603 = vmatprep.mubr.f32.mxu0 0.0
    %1604 = vmatmul.mubr.f32.gmra.mxu0 %v1535
    %v1605 = vpop.f32.mrf.mxu0
    %v1606 = vadd.f32 %v1446, %v1605
    %v1607 = vpop.f32.mrf.mxu0
    %1608 = vdwg.mxu0
    %1610 = vrot.lane.b32.xlu0 %v1308, 112
    %v1611 = vpop.permute.xlu0 %1610
    %1613 = vrot.lane.b32.xlu0 %v1348, 80
    %v1614 = vpop.permute.xlu0 %1613
    %v1615 = vsel %vm221, %v1611, 0
    %v1617 = vsel %vm221, %v1614, 0
    %1619 = vmatprep.subr.mxu0 0.0
    %1620 = vmatpush1.xpose.msra.mxu0 0.0
    %1621 = vmatprep.subr.mxu0 0.0
    %1622 = vmatpush1.xpose.msra.mxu0 0.0
    %1623 = vmatprep.subr.mxu0 0.0
    %1624 = vmatpush1.xpose.msra.mxu0 0.0
    %1625 = vmatprep.subr.mxu0 0.0
    %1626 = vmatpush1.xpose.msra.mxu0 0.0
    %1627 = vmatprep.subr.mxu0 0.0
    %1628 = vmatpush1.xpose.msra.mxu0 0.0
    %1629 = vmatprep.subr.mxu0 0.0
    %1630 = vmatpush1.xpose.msra.mxu0 0.0
    %1631 = vmatprep.subr.mxu0 0.0
    %1632 = vmatpush1.xpose.msra.mxu0 0.0
    %1633 = vmatprep.subr.mxu0 0.0
    %1634 = vmatpush1.xpose.msra.mxu0 0.0
    %1635 = vmatprep.subr.mxu0 0.0
    %1636 = vmatpush1.xpose.msra.mxu0 0.0
    %1637 = vmatprep.subr.mxu0 0.0
    %1638 = vmatpush1.xpose.msra.mxu0 0.0
    %1639 = vmatprep.subr.mxu0 0.0
    %1640 = vmatpush1.xpose.msra.mxu0 0.0
    %1641 = vmatprep.subr.mxu0 0.0
    %1642 = vmatpush1.xpose.msra.mxu0 0.0
    %1643 = vmatprep.subr.mxu0 0.0
    %1644 = vmatpush1.xpose.msra.mxu0 0.0
    %1645 = vmatprep.subr.mxu0 0.0
    %1646 = vmatpush1.xpose.msra.mxu0 0.0
    %1647 = vmatprep.subr.mxu0 0.0
    %1648 = vmatpush1.xpose.msra.mxu0 0.0
    %1649 = vmatprep.subr.mxu0 0.0
    %1650 = vmatpush1.xpose.msra.mxu0 %v1617
    %1651 = vmatprep.subr.mxu0 0.0
    %1652 = vmatpush2.xpose.msra.mxu0 0.0
    %1653 = vmatprep.subr.mxu0 0.0
    %1654 = vmatpush2.xpose.msra.mxu0 0.0
    %1655 = vmatprep.subr.mxu0 0.0
    %1656 = vmatpush2.xpose.msra.mxu0 0.0
    %1657 = vmatprep.subr.mxu0 0.0
    %1658 = vmatpush2.xpose.msra.mxu0 0.0
    %1659 = vmatprep.subr.mxu0 0.0
    %1660 = vmatpush2.xpose.msra.mxu0 0.0
    %1661 = vmatprep.subr.mxu0 0.0
    %1662 = vmatpush2.xpose.msra.mxu0 0.0
    %1663 = vmatprep.subr.mxu0 0.0
    %1664 = vmatpush2.xpose.msra.mxu0 0.0
    %1665 = vmatprep.subr.mxu0 0.0
    %1666 = vmatpush2.xpose.msra.mxu0 0.0
    %1667 = vmatprep.subr.mxu0 0.0
    %1668 = vmatpush2.xpose.msra.mxu0 0.0
    %1669 = vmatprep.subr.mxu0 0.0
    %1670 = vmatpush2.xpose.msra.mxu0 0.0
    %1671 = vmatprep.subr.mxu0 0.0
    %1672 = vmatpush2.xpose.msra.mxu0 0.0
    %1673 = vmatprep.subr.mxu0 0.0
    %1674 = vmatpush2.xpose.msra.mxu0 0.0
    %1675 = vmatprep.subr.mxu0 0.0
    %1676 = vmatpush2.xpose.msra.mxu0 0.0
    %1677 = vmatprep.subr.mxu0 0.0
    %1678 = vmatpush2.xpose.msra.mxu0 0.0
    %1679 = vmatprep.subr.mxu0 0.0
    %1680 = vmatpush2.xpose.msra.mxu0 0.0
    %1681 = vmatprep.subr.mxu0 0.0
    %1682 = vmatpush2.xpose.msra.mxu0 0.0
    %1683 = vmatprep.mubr.f32.mxu0 0.0
    %1684 = vmatmul.mubr.f32.gmra.mxu0 %v1615
    %v1685 = vpop.f32.mrf.mxu0
    %v1686 = vadd.f32 %v1526, %v1685
    %v1687 = vpop.f32.mrf.mxu0
    %1688 = vdwg.mxu0
    %v1689 = vsel %vm533, %v1606, -1e+30
    %v1690 = vsel %vm533, %v1686, -1e+30
    %v1691 = vsel %vm536, %v1689, -inf
    %1692 = vmax.xlane.f32.xlu0 %v1691
    %v1693 = vpop.xlane.xlu0 %1692
    %v1694 = vsel %vm536, %v1690, -inf
    %1695 = vmax.xlane.f32.xlu0 %v1694
    %v1696 = vpop.xlane.xlu0 %1695
    %v1697 = vsub.f32 %v1689, %v1693
    %v1698 = vsub.f32 %v1690, %v1696
    %v1699 = vmul.f32 %v1697, 1.442695
    %v1700 = vpow.pop %v1699
    %v1701 = vmul.f32 %v1698, 1.442695
    %v1702 = vpow.pop %v1701
    %v1703 = vsel %vm536, %v1700, 0.0
    %1704 = vadd.xlane.f32.xlu0 %v1703
    %v1705 = vpop.xlane.xlu0 %1704
    %v1706 = vsel %vm536, %v1702, 0.0
    %1707 = vadd.xlane.f32.xlu0 %v1706
    %v1708 = vpop.xlane.xlu0 %1707
    %1709 = vrot.lane.b32.xlu0 %v124, 48
    %v1710 = vpop.permute.xlu0 %1709
    %v1713 = vsel %vm536, %v1700, 0
    %1715 = vmatprep.subr.mxu0 0.0
    %1716 = vmatpush1.msra.mxu0 0.0
    %1717 = vmatprep.subr.mxu0 0.0
    %1718 = vmatpush1.msra.mxu0 0.0
    %1719 = vmatprep.subr.mxu0 0.0
    %1720 = vmatpush1.msra.mxu0 0.0
    %1721 = vmatprep.subr.mxu0 0.0
    %1722 = vmatpush1.msra.mxu0 0.0
    %1723 = vmatprep.subr.mxu0 0.0
    %1724 = vmatpush1.msra.mxu0 0.0
    %1725 = vmatprep.subr.mxu0 0.0
    %1726 = vmatpush1.msra.mxu0 0.0
    %1727 = vmatprep.subr.mxu0 0.0
    %1728 = vmatpush1.msra.mxu0 0.0
    %1729 = vmatprep.subr.mxu0 0.0
    %1730 = vmatpush1.msra.mxu0 0.0
    %1731 = vmatprep.subr.mxu0 0.0
    %1732 = vmatpush1.msra.mxu0 0.0
    %1733 = vmatprep.subr.mxu0 0.0
    %1734 = vmatpush1.msra.mxu0 0.0
    %1735 = vmatprep.subr.mxu0 0.0
    %1736 = vmatpush1.msra.mxu0 0.0
    %1737 = vmatprep.subr.mxu0 0.0
    %1738 = vmatpush1.msra.mxu0 0.0
    %1739 = vmatprep.subr.mxu0 0.0
    %1740 = vmatpush1.msra.mxu0 0.0
    %1741 = vmatprep.subr.mxu0 0.0
    %1742 = vmatpush1.msra.mxu0 0.0
    %1743 = vmatprep.subr.mxu0 0.0
    %1744 = vmatpush1.msra.mxu0 0.0
    %1745 = vmatprep.subr.mxu0 0.0
    %1746 = vmatpush1.msra.mxu0 %v1710
    %1747 = vmatprep.subr.mxu0 0.0
    %1748 = vmatpush2.msra.mxu0 0.0
    %1749 = vmatprep.subr.mxu0 0.0
    %1750 = vmatpush2.msra.mxu0 0.0
    %1751 = vmatprep.subr.mxu0 0.0
    %1752 = vmatpush2.msra.mxu0 0.0
    %1753 = vmatprep.subr.mxu0 0.0
    %1754 = vmatpush2.msra.mxu0 0.0
    %1755 = vmatprep.subr.mxu0 0.0
    %1756 = vmatpush2.msra.mxu0 0.0
    %1757 = vmatprep.subr.mxu0 0.0
    %1758 = vmatpush2.msra.mxu0 0.0
    %1759 = vmatprep.subr.mxu0 0.0
    %1760 = vmatpush2.msra.mxu0 0.0
    %1761 = vmatprep.subr.mxu0 0.0
    %1762 = vmatpush2.msra.mxu0 0.0
    %1763 = vmatprep.subr.mxu0 0.0
    %1764 = vmatpush2.msra.mxu0 0.0
    %1765 = vmatprep.subr.mxu0 0.0
    %1766 = vmatpush2.msra.mxu0 0.0
    %1767 = vmatprep.subr.mxu0 0.0
    %1768 = vmatpush2.msra.mxu0 0.0
    %1769 = vmatprep.subr.mxu0 0.0
    %1770 = vmatpush2.msra.mxu0 0.0
    %1771 = vmatprep.subr.mxu0 0.0
    %1772 = vmatpush2.msra.mxu0 0.0
    %1773 = vmatprep.subr.mxu0 0.0
    %1774 = vmatpush2.msra.mxu0 0.0
    %1775 = vmatprep.subr.mxu0 0.0
    %1776 = vmatpush2.msra.mxu0 0.0
    %1777 = vmatprep.subr.mxu0 0.0
    %1778 = vmatpush2.msra.mxu0 0.0
    %1779 = vmatprep.mubr.f32.mxu0 0.0
    %1780 = vmatmul.mubr.f32.gmra.mxu0 %v1713
    %v1781 = vpop.f32.mrf.mxu0
    %v1782 = vadd.f32 0.0, %v1781
    %v1783 = vpop.f32.mrf.mxu0
    %1784 = vdwg.mxu0
    %1785 = vrot.lane.b32.xlu0 %v129, 48
    %v1786 = vpop.permute.xlu0 %1785
    %v1789 = vsel %vm536, %v1702, 0
    %1791 = vmatprep.subr.mxu0 0.0
    %1792 = vmatpush1.msra.mxu0 0.0
    %1793 = vmatprep.subr.mxu0 0.0
    %1794 = vmatpush1.msra.mxu0 0.0
    %1795 = vmatprep.subr.mxu0 0.0
    %1796 = vmatpush1.msra.mxu0 0.0
    %1797 = vmatprep.subr.mxu0 0.0
    %1798 = vmatpush1.msra.mxu0 0.0
    %1799 = vmatprep.subr.mxu0 0.0
    %1800 = vmatpush1.msra.mxu0 0.0
    %1801 = vmatprep.subr.mxu0 0.0
    %1802 = vmatpush1.msra.mxu0 0.0
    %1803 = vmatprep.subr.mxu0 0.0
    %1804 = vmatpush1.msra.mxu0 0.0
    %1805 = vmatprep.subr.mxu0 0.0
    %1806 = vmatpush1.msra.mxu0 0.0
    %1807 = vmatprep.subr.mxu0 0.0
    %1808 = vmatpush1.msra.mxu0 0.0
    %1809 = vmatprep.subr.mxu0 0.0
    %1810 = vmatpush1.msra.mxu0 0.0
    %1811 = vmatprep.subr.mxu0 0.0
    %1812 = vmatpush1.msra.mxu0 0.0
    %1813 = vmatprep.subr.mxu0 0.0
    %1814 = vmatpush1.msra.mxu0 0.0
    %1815 = vmatprep.subr.mxu0 0.0
    %1816 = vmatpush1.msra.mxu0 0.0
    %1817 = vmatprep.subr.mxu0 0.0
    %1818 = vmatpush1.msra.mxu0 0.0
    %1819 = vmatprep.subr.mxu0 0.0
    %1820 = vmatpush1.msra.mxu0 0.0
    %1821 = vmatprep.subr.mxu0 0.0
    %1822 = vmatpush1.msra.mxu0 %v1786
    %1823 = vmatprep.subr.mxu0 0.0
    %1824 = vmatpush2.msra.mxu0 0.0
    %1825 = vmatprep.subr.mxu0 0.0
    %1826 = vmatpush2.msra.mxu0 0.0
    %1827 = vmatprep.subr.mxu0 0.0
    %1828 = vmatpush2.msra.mxu0 0.0
    %1829 = vmatprep.subr.mxu0 0.0
    %1830 = vmatpush2.msra.mxu0 0.0
    %1831 = vmatprep.subr.mxu0 0.0
    %1832 = vmatpush2.msra.mxu0 0.0
    %1833 = vmatprep.subr.mxu0 0.0
    %1834 = vmatpush2.msra.mxu0 0.0
    %1835 = vmatprep.subr.mxu0 0.0
    %1836 = vmatpush2.msra.mxu0 0.0
    %1837 = vmatprep.subr.mxu0 0.0
    %1838 = vmatpush2.msra.mxu0 0.0
    %1839 = vmatprep.subr.mxu0 0.0
    %1840 = vmatpush2.msra.mxu0 0.0
    %1841 = vmatprep.subr.mxu0 0.0
    %1842 = vmatpush2.msra.mxu0 0.0
    %1843 = vmatprep.subr.mxu0 0.0
    %1844 = vmatpush2.msra.mxu0 0.0
    %1845 = vmatprep.subr.mxu0 0.0
    %1846 = vmatpush2.msra.mxu0 0.0
    %1847 = vmatprep.subr.mxu0 0.0
    %1848 = vmatpush2.msra.mxu0 0.0
    %1849 = vmatprep.subr.mxu0 0.0
    %1850 = vmatpush2.msra.mxu0 0.0
    %1851 = vmatprep.subr.mxu0 0.0
    %1852 = vmatpush2.msra.mxu0 0.0
    %1853 = vmatprep.subr.mxu0 0.0
    %1854 = vmatpush2.msra.mxu0 0.0
    %1855 = vmatprep.mubr.f32.mxu0 0.0
    %1856 = vmatmul.mubr.f32.gmra.mxu0 %v1789
    %v1857 = vpop.f32.mrf.mxu0
    %v1858 = vadd.f32 0.0, %v1857
    %v1859 = vpop.f32.mrf.mxu0
    %1860 = vdwg.mxu0
    %v1861 = vrcp.pop %v1705
    %v1862 = vrcp.pop %v1708
    %v1863 = vmul.f32 %v1782, %v1861
    %v1864 = vmul.f32 %v1858, %v1862
    %1865 = vrot.lane.b32.xlu0 %v132, 24
    %v1866 = vpop.permute.xlu0 %1865
    %v1868 = vmul.f32 %v124, %v1866
    %v1869 = vmul.f32 %v129, %v1866
    %1870 = vrot.lane.b32.xlu0 %v133, 28
    %v1871 = vpop.permute.xlu0 %1870
    %v1873 = vmul.f32 %v124, %v1871
    %v1874 = vmul.f32 %v129, %v1871
    %1877 = vrot.lane.b32.xlu0 %v1873, 124
    %v1878 = vpop.permute.xlu0 %1877
    %1879 = vrot.lane.b32.xlu0 %v1874, 124
    %v1880 = vpop.permute.xlu0 %1879
    %v1883 = vadd.f32 %v1868, %v1878
    %v1884 = vadd.f32 %v1869, %v1880
    %1885 = vrot.lane.b32.xlu0 %v132, 28
    %v1886 = vpop.permute.xlu0 %1885
    %v1888 = vmul.f32 %v124, %v1886
    %v1889 = vmul.f32 %v129, %v1886
    %1890 = vrot.lane.b32.xlu0 %v133, 24
    %v1891 = vpop.permute.xlu0 %1890
    %v1893 = vmul.f32 %v124, %v1891
    %v1894 = vmul.f32 %v129, %v1891
    %1897 = vrot.lane.b32.xlu0 %v1893, 4
    %v1898 = vpop.permute.xlu0 %1897
    %1899 = vrot.lane.b32.xlu0 %v1894, 4
    %v1900 = vpop.permute.xlu0 %1899
    %v1903 = vsub.f32 %v1888, %v1898
    %v1904 = vsub.f32 %v1889, %v1900
    %1905 = vrot.lane.b32.xlu0 %v132, 56
    %v1906 = vpop.permute.xlu0 %1905
    %v1908 = vmul.f32 %v124, %v1906
    %v1909 = vmul.f32 %v129, %v1906
    %1910 = vrot.lane.b32.xlu0 %v133, 60
    %v1911 = vpop.permute.xlu0 %1910
    %v1913 = vmul.f32 %v124, %v1911
    %v1914 = vmul.f32 %v129, %v1911
    %1917 = vrot.lane.b32.xlu0 %v1913, 124
    %v1918 = vpop.permute.xlu0 %1917
    %1919 = vrot.lane.b32.xlu0 %v1914, 124
    %v1920 = vpop.permute.xlu0 %1919
    %v1923 = vadd.f32 %v1908, %v1918
    %v1924 = vadd.f32 %v1909, %v1920
    %1925 = vrot.lane.b32.xlu0 %v132, 60
    %v1926 = vpop.permute.xlu0 %1925
    %v1928 = vmul.f32 %v124, %v1926
    %v1929 = vmul.f32 %v129, %v1926
    %1930 = vrot.lane.b32.xlu0 %v133, 56
    %v1931 = vpop.permute.xlu0 %1930
    %v1933 = vmul.f32 %v124, %v1931
    %v1934 = vmul.f32 %v129, %v1931
    %1937 = vrot.lane.b32.xlu0 %v1933, 4
    %v1938 = vpop.permute.xlu0 %1937
    %1939 = vrot.lane.b32.xlu0 %v1934, 4
    %v1940 = vpop.permute.xlu0 %1939
    %v1943 = vsub.f32 %v1928, %v1938
    %v1944 = vsub.f32 %v1929, %v1940
    %1946 = vrot.lane.b32.xlu0 %v1903, 100
    %v1947 = vpop.permute.xlu0 %1946
    %1949 = vrot.lane.b32.xlu0 %v1943, 68
    %v1950 = vpop.permute.xlu0 %1949
    %v1951 = vsel %vm221, %v1947, 0
    %v1953 = vsel %vm221, %v1950, 0
    %1955 = vmatprep.subr.mxu0 0.0
    %1956 = vmatpush1.xpose.msra.mxu0 0.0
    %1957 = vmatprep.subr.mxu0 0.0
    %1958 = vmatpush1.xpose.msra.mxu0 0.0
    %1959 = vmatprep.subr.mxu0 0.0
    %1960 = vmatpush1.xpose.msra.mxu0 0.0
    %1961 = vmatprep.subr.mxu0 0.0
    %1962 = vmatpush1.xpose.msra.mxu0 0.0
    %1963 = vmatprep.subr.mxu0 0.0
    %1964 = vmatpush1.xpose.msra.mxu0 0.0
    %1965 = vmatprep.subr.mxu0 0.0
    %1966 = vmatpush1.xpose.msra.mxu0 0.0
    %1967 = vmatprep.subr.mxu0 0.0
    %1968 = vmatpush1.xpose.msra.mxu0 0.0
    %1969 = vmatprep.subr.mxu0 0.0
    %1970 = vmatpush1.xpose.msra.mxu0 0.0
    %1971 = vmatprep.subr.mxu0 0.0
    %1972 = vmatpush1.xpose.msra.mxu0 0.0
    %1973 = vmatprep.subr.mxu0 0.0
    %1974 = vmatpush1.xpose.msra.mxu0 0.0
    %1975 = vmatprep.subr.mxu0 0.0
    %1976 = vmatpush1.xpose.msra.mxu0 0.0
    %1977 = vmatprep.subr.mxu0 0.0
    %1978 = vmatpush1.xpose.msra.mxu0 0.0
    %1979 = vmatprep.subr.mxu0 0.0
    %1980 = vmatpush1.xpose.msra.mxu0 0.0
    %1981 = vmatprep.subr.mxu0 0.0
    %1982 = vmatpush1.xpose.msra.mxu0 0.0
    %1983 = vmatprep.subr.mxu0 0.0
    %1984 = vmatpush1.xpose.msra.mxu0 0.0
    %1985 = vmatprep.subr.mxu0 0.0
    %1986 = vmatpush1.xpose.msra.mxu0 %v1953
    %1987 = vmatprep.subr.mxu0 0.0
    %1988 = vmatpush2.xpose.msra.mxu0 0.0
    %1989 = vmatprep.subr.mxu0 0.0
    %1990 = vmatpush2.xpose.msra.mxu0 0.0
    %1991 = vmatprep.subr.mxu0 0.0
    %1992 = vmatpush2.xpose.msra.mxu0 0.0
    %1993 = vmatprep.subr.mxu0 0.0
    %1994 = vmatpush2.xpose.msra.mxu0 0.0
    %1995 = vmatprep.subr.mxu0 0.0
    %1996 = vmatpush2.xpose.msra.mxu0 0.0
    %1997 = vmatprep.subr.mxu0 0.0
    %1998 = vmatpush2.xpose.msra.mxu0 0.0
    %1999 = vmatprep.subr.mxu0 0.0
    %2000 = vmatpush2.xpose.msra.mxu0 0.0
    %2001 = vmatprep.subr.mxu0 0.0
    %2002 = vmatpush2.xpose.msra.mxu0 0.0
    %2003 = vmatprep.subr.mxu0 0.0
    %2004 = vmatpush2.xpose.msra.mxu0 0.0
    %2005 = vmatprep.subr.mxu0 0.0
    %2006 = vmatpush2.xpose.msra.mxu0 0.0
    %2007 = vmatprep.subr.mxu0 0.0
    %2008 = vmatpush2.xpose.msra.mxu0 0.0
    %2009 = vmatprep.subr.mxu0 0.0
    %2010 = vmatpush2.xpose.msra.mxu0 0.0
    %2011 = vmatprep.subr.mxu0 0.0
    %2012 = vmatpush2.xpose.msra.mxu0 0.0
    %2013 = vmatprep.subr.mxu0 0.0
    %2014 = vmatpush2.xpose.msra.mxu0 0.0
    %2015 = vmatprep.subr.mxu0 0.0
    %2016 = vmatpush2.xpose.msra.mxu0 0.0
    %2017 = vmatprep.subr.mxu0 0.0
    %2018 = vmatpush2.xpose.msra.mxu0 0.0
    %2019 = vmatprep.mubr.f32.mxu0 0.0
    %2020 = vmatmul.mubr.f32.gmra.mxu0 %v1951
    %v2021 = vpop.f32.mrf.mxu0
    %v2022 = vadd.f32 0.0, %v2021
    %v2023 = vpop.f32.mrf.mxu0
    %2024 = vdwg.mxu0
    %2026 = vrot.lane.b32.xlu0 %v1904, 100
    %v2027 = vpop.permute.xlu0 %2026
    %2029 = vrot.lane.b32.xlu0 %v1944, 68
    %v2030 = vpop.permute.xlu0 %2029
    %v2031 = vsel %vm221, %v2027, 0
    %v2033 = vsel %vm221, %v2030, 0
    %2035 = vmatprep.subr.mxu0 0.0
    %2036 = vmatpush1.xpose.msra.mxu0 0.0
    %2037 = vmatprep.subr.mxu0 0.0
    %2038 = vmatpush1.xpose.msra.mxu0 0.0
    %2039 = vmatprep.subr.mxu0 0.0
    %2040 = vmatpush1.xpose.msra.mxu0 0.0
    %2041 = vmatprep.subr.mxu0 0.0
    %2042 = vmatpush1.xpose.msra.mxu0 0.0
    %2043 = vmatprep.subr.mxu0 0.0
    %2044 = vmatpush1.xpose.msra.mxu0 0.0
    %2045 = vmatprep.subr.mxu0 0.0
    %2046 = vmatpush1.xpose.msra.mxu0 0.0
    %2047 = vmatprep.subr.mxu0 0.0
    %2048 = vmatpush1.xpose.msra.mxu0 0.0
    %2049 = vmatprep.subr.mxu0 0.0
    %2050 = vmatpush1.xpose.msra.mxu0 0.0
    %2051 = vmatprep.subr.mxu0 0.0
    %2052 = vmatpush1.xpose.msra.mxu0 0.0
    %2053 = vmatprep.subr.mxu0 0.0
    %2054 = vmatpush1.xpose.msra.mxu0 0.0
    %2055 = vmatprep.subr.mxu0 0.0
    %2056 = vmatpush1.xpose.msra.mxu0 0.0
    %2057 = vmatprep.subr.mxu0 0.0
    %2058 = vmatpush1.xpose.msra.mxu0 0.0
    %2059 = vmatprep.subr.mxu0 0.0
    %2060 = vmatpush1.xpose.msra.mxu0 0.0
    %2061 = vmatprep.subr.mxu0 0.0
    %2062 = vmatpush1.xpose.msra.mxu0 0.0
    %2063 = vmatprep.subr.mxu0 0.0
    %2064 = vmatpush1.xpose.msra.mxu0 0.0
    %2065 = vmatprep.subr.mxu0 0.0
    %2066 = vmatpush1.xpose.msra.mxu0 %v2033
    %2067 = vmatprep.subr.mxu0 0.0
    %2068 = vmatpush2.xpose.msra.mxu0 0.0
    %2069 = vmatprep.subr.mxu0 0.0
    %2070 = vmatpush2.xpose.msra.mxu0 0.0
    %2071 = vmatprep.subr.mxu0 0.0
    %2072 = vmatpush2.xpose.msra.mxu0 0.0
    %2073 = vmatprep.subr.mxu0 0.0
    %2074 = vmatpush2.xpose.msra.mxu0 0.0
    %2075 = vmatprep.subr.mxu0 0.0
    %2076 = vmatpush2.xpose.msra.mxu0 0.0
    %2077 = vmatprep.subr.mxu0 0.0
    %2078 = vmatpush2.xpose.msra.mxu0 0.0
    %2079 = vmatprep.subr.mxu0 0.0
    %2080 = vmatpush2.xpose.msra.mxu0 0.0
    %2081 = vmatprep.subr.mxu0 0.0
    %2082 = vmatpush2.xpose.msra.mxu0 0.0
    %2083 = vmatprep.subr.mxu0 0.0
    %2084 = vmatpush2.xpose.msra.mxu0 0.0
    %2085 = vmatprep.subr.mxu0 0.0
    %2086 = vmatpush2.xpose.msra.mxu0 0.0
    %2087 = vmatprep.subr.mxu0 0.0
    %2088 = vmatpush2.xpose.msra.mxu0 0.0
    %2089 = vmatprep.subr.mxu0 0.0
    %2090 = vmatpush2.xpose.msra.mxu0 0.0
    %2091 = vmatprep.subr.mxu0 0.0
    %2092 = vmatpush2.xpose.msra.mxu0 0.0
    %2093 = vmatprep.subr.mxu0 0.0
    %2094 = vmatpush2.xpose.msra.mxu0 0.0
    %2095 = vmatprep.subr.mxu0 0.0
    %2096 = vmatpush2.xpose.msra.mxu0 0.0
    %2097 = vmatprep.subr.mxu0 0.0
    %2098 = vmatpush2.xpose.msra.mxu0 0.0
    %2099 = vmatprep.mubr.f32.mxu0 0.0
    %2100 = vmatmul.mubr.f32.gmra.mxu0 %v2031
    %v2101 = vpop.f32.mrf.mxu0
    %v2102 = vadd.f32 0.0, %v2101
    %v2103 = vpop.f32.mrf.mxu0
    %2104 = vdwg.mxu0
    %2106 = vrot.lane.b32.xlu0 %v1883, 104
    %v2107 = vpop.permute.xlu0 %2106
    %2109 = vrot.lane.b32.xlu0 %v1923, 72
    %v2110 = vpop.permute.xlu0 %2109
    %v2111 = vsel %vm221, %v2107, 0
    %v2113 = vsel %vm221, %v2110, 0
    %2115 = vmatprep.subr.mxu0 0.0
    %2116 = vmatpush1.xpose.msra.mxu0 0.0
    %2117 = vmatprep.subr.mxu0 0.0
    %2118 = vmatpush1.xpose.msra.mxu0 0.0
    %2119 = vmatprep.subr.mxu0 0.0
    %2120 = vmatpush1.xpose.msra.mxu0 0.0
    %2121 = vmatprep.subr.mxu0 0.0
    %2122 = vmatpush1.xpose.msra.mxu0 0.0
    %2123 = vmatprep.subr.mxu0 0.0
    %2124 = vmatpush1.xpose.msra.mxu0 0.0
    %2125 = vmatprep.subr.mxu0 0.0
    %2126 = vmatpush1.xpose.msra.mxu0 0.0
    %2127 = vmatprep.subr.mxu0 0.0
    %2128 = vmatpush1.xpose.msra.mxu0 0.0
    %2129 = vmatprep.subr.mxu0 0.0
    %2130 = vmatpush1.xpose.msra.mxu0 0.0
    %2131 = vmatprep.subr.mxu0 0.0
    %2132 = vmatpush1.xpose.msra.mxu0 0.0
    %2133 = vmatprep.subr.mxu0 0.0
    %2134 = vmatpush1.xpose.msra.mxu0 0.0
    %2135 = vmatprep.subr.mxu0 0.0
    %2136 = vmatpush1.xpose.msra.mxu0 0.0
    %2137 = vmatprep.subr.mxu0 0.0
    %2138 = vmatpush1.xpose.msra.mxu0 0.0
    %2139 = vmatprep.subr.mxu0 0.0
    %2140 = vmatpush1.xpose.msra.mxu0 0.0
    %2141 = vmatprep.subr.mxu0 0.0
    %2142 = vmatpush1.xpose.msra.mxu0 0.0
    %2143 = vmatprep.subr.mxu0 0.0
    %2144 = vmatpush1.xpose.msra.mxu0 0.0
    %2145 = vmatprep.subr.mxu0 0.0
    %2146 = vmatpush1.xpose.msra.mxu0 %v2113
    %2147 = vmatprep.subr.mxu0 0.0
    %2148 = vmatpush2.xpose.msra.mxu0 0.0
    %2149 = vmatprep.subr.mxu0 0.0
    %2150 = vmatpush2.xpose.msra.mxu0 0.0
    %2151 = vmatprep.subr.mxu0 0.0
    %2152 = vmatpush2.xpose.msra.mxu0 0.0
    %2153 = vmatprep.subr.mxu0 0.0
    %2154 = vmatpush2.xpose.msra.mxu0 0.0
    %2155 = vmatprep.subr.mxu0 0.0
    %2156 = vmatpush2.xpose.msra.mxu0 0.0
    %2157 = vmatprep.subr.mxu0 0.0
    %2158 = vmatpush2.xpose.msra.mxu0 0.0
    %2159 = vmatprep.subr.mxu0 0.0
    %2160 = vmatpush2.xpose.msra.mxu0 0.0
    %2161 = vmatprep.subr.mxu0 0.0
    %2162 = vmatpush2.xpose.msra.mxu0 0.0
    %2163 = vmatprep.subr.mxu0 0.0
    %2164 = vmatpush2.xpose.msra.mxu0 0.0
    %2165 = vmatprep.subr.mxu0 0.0
    %2166 = vmatpush2.xpose.msra.mxu0 0.0
    %2167 = vmatprep.subr.mxu0 0.0
    %2168 = vmatpush2.xpose.msra.mxu0 0.0
    %2169 = vmatprep.subr.mxu0 0.0
    %2170 = vmatpush2.xpose.msra.mxu0 0.0
    %2171 = vmatprep.subr.mxu0 0.0
    %2172 = vmatpush2.xpose.msra.mxu0 0.0
    %2173 = vmatprep.subr.mxu0 0.0
    %2174 = vmatpush2.xpose.msra.mxu0 0.0
    %2175 = vmatprep.subr.mxu0 0.0
    %2176 = vmatpush2.xpose.msra.mxu0 0.0
    %2177 = vmatprep.subr.mxu0 0.0
    %2178 = vmatpush2.xpose.msra.mxu0 0.0
    %2179 = vmatprep.mubr.f32.mxu0 0.0
    %2180 = vmatmul.mubr.f32.gmra.mxu0 %v2111
    %v2181 = vpop.f32.mrf.mxu0
    %v2182 = vadd.f32 %v2022, %v2181
    %v2183 = vpop.f32.mrf.mxu0
    %2184 = vdwg.mxu0
    %2186 = vrot.lane.b32.xlu0 %v1884, 104
    %v2187 = vpop.permute.xlu0 %2186
    %2189 = vrot.lane.b32.xlu0 %v1924, 72
    %v2190 = vpop.permute.xlu0 %2189
    %v2191 = vsel %vm221, %v2187, 0
    %v2193 = vsel %vm221, %v2190, 0
    %2195 = vmatprep.subr.mxu0 0.0
    %2196 = vmatpush1.xpose.msra.mxu0 0.0
    %2197 = vmatprep.subr.mxu0 0.0
    %2198 = vmatpush1.xpose.msra.mxu0 0.0
    %2199 = vmatprep.subr.mxu0 0.0
    %2200 = vmatpush1.xpose.msra.mxu0 0.0
    %2201 = vmatprep.subr.mxu0 0.0
    %2202 = vmatpush1.xpose.msra.mxu0 0.0
    %2203 = vmatprep.subr.mxu0 0.0
    %2204 = vmatpush1.xpose.msra.mxu0 0.0
    %2205 = vmatprep.subr.mxu0 0.0
    %2206 = vmatpush1.xpose.msra.mxu0 0.0
    %2207 = vmatprep.subr.mxu0 0.0
    %2208 = vmatpush1.xpose.msra.mxu0 0.0
    %2209 = vmatprep.subr.mxu0 0.0
    %2210 = vmatpush1.xpose.msra.mxu0 0.0
    %2211 = vmatprep.subr.mxu0 0.0
    %2212 = vmatpush1.xpose.msra.mxu0 0.0
    %2213 = vmatprep.subr.mxu0 0.0
    %2214 = vmatpush1.xpose.msra.mxu0 0.0
    %2215 = vmatprep.subr.mxu0 0.0
    %2216 = vmatpush1.xpose.msra.mxu0 0.0
    %2217 = vmatprep.subr.mxu0 0.0
    %2218 = vmatpush1.xpose.msra.mxu0 0.0
    %2219 = vmatprep.subr.mxu0 0.0
    %2220 = vmatpush1.xpose.msra.mxu0 0.0
    %2221 = vmatprep.subr.mxu0 0.0
    %2222 = vmatpush1.xpose.msra.mxu0 0.0
    %2223 = vmatprep.subr.mxu0 0.0
    %2224 = vmatpush1.xpose.msra.mxu0 0.0
    %2225 = vmatprep.subr.mxu0 0.0
    %2226 = vmatpush1.xpose.msra.mxu0 %v2193
    %2227 = vmatprep.subr.mxu0 0.0
    %2228 = vmatpush2.xpose.msra.mxu0 0.0
    %2229 = vmatprep.subr.mxu0 0.0
    %2230 = vmatpush2.xpose.msra.mxu0 0.0
    %2231 = vmatprep.subr.mxu0 0.0
    %2232 = vmatpush2.xpose.msra.mxu0 0.0
    %2233 = vmatprep.subr.mxu0 0.0
    %2234 = vmatpush2.xpose.msra.mxu0 0.0
    %2235 = vmatprep.subr.mxu0 0.0
    %2236 = vmatpush2.xpose.msra.mxu0 0.0
    %2237 = vmatprep.subr.mxu0 0.0
    %2238 = vmatpush2.xpose.msra.mxu0 0.0
    %2239 = vmatprep.subr.mxu0 0.0
    %2240 = vmatpush2.xpose.msra.mxu0 0.0
    %2241 = vmatprep.subr.mxu0 0.0
    %2242 = vmatpush2.xpose.msra.mxu0 0.0
    %2243 = vmatprep.subr.mxu0 0.0
    %2244 = vmatpush2.xpose.msra.mxu0 0.0
    %2245 = vmatprep.subr.mxu0 0.0
    %2246 = vmatpush2.xpose.msra.mxu0 0.0
    %2247 = vmatprep.subr.mxu0 0.0
    %2248 = vmatpush2.xpose.msra.mxu0 0.0
    %2249 = vmatprep.subr.mxu0 0.0
    %2250 = vmatpush2.xpose.msra.mxu0 0.0
    %2251 = vmatprep.subr.mxu0 0.0
    %2252 = vmatpush2.xpose.msra.mxu0 0.0
    %2253 = vmatprep.subr.mxu0 0.0
    %2254 = vmatpush2.xpose.msra.mxu0 0.0
    %2255 = vmatprep.subr.mxu0 0.0
    %2256 = vmatpush2.xpose.msra.mxu0 0.0
    %2257 = vmatprep.subr.mxu0 0.0
    %2258 = vmatpush2.xpose.msra.mxu0 0.0
    %2259 = vmatprep.mubr.f32.mxu0 0.0
    %2260 = vmatmul.mubr.f32.gmra.mxu0 %v2191
    %v2261 = vpop.f32.mrf.mxu0
    %v2262 = vadd.f32 %v2102, %v2261
    %v2263 = vpop.f32.mrf.mxu0
    %2264 = vdwg.mxu0
    %v2265 = vsel %vm533, %v2182, -1e+30
    %v2266 = vsel %vm533, %v2262, -1e+30
    %v2267 = vsel %vm536, %v2265, -inf
    %2268 = vmax.xlane.f32.xlu0 %v2267
    %v2269 = vpop.xlane.xlu0 %2268
    %v2270 = vsel %vm536, %v2266, -inf
    %2271 = vmax.xlane.f32.xlu0 %v2270
    %v2272 = vpop.xlane.xlu0 %2271
    %v2273 = vsub.f32 %v2265, %v2269
    %v2274 = vsub.f32 %v2266, %v2272
    %v2275 = vmul.f32 %v2273, 1.442695
    %v2276 = vpow.pop %v2275
    %v2277 = vmul.f32 %v2274, 1.442695
    %v2278 = vpow.pop %v2277
    %v2279 = vsel %vm536, %v2276, 0.0
    %2280 = vadd.xlane.f32.xlu0 %v2279
    %v2281 = vpop.xlane.xlu0 %2280
    %v2282 = vsel %vm536, %v2278, 0.0
    %2283 = vadd.xlane.f32.xlu0 %v2282
    %v2284 = vpop.xlane.xlu0 %2283
    %2285 = vrot.lane.b32.xlu0 %v124, 40
    %v2286 = vpop.permute.xlu0 %2285
    %v2289 = vsel %vm536, %v2276, 0
    %2291 = vmatprep.subr.mxu0 0.0
    %2292 = vmatpush1.msra.mxu0 0.0
    %2293 = vmatprep.subr.mxu0 0.0
    %2294 = vmatpush1.msra.mxu0 0.0
    %2295 = vmatprep.subr.mxu0 0.0
    %2296 = vmatpush1.msra.mxu0 0.0
    %2297 = vmatprep.subr.mxu0 0.0
    %2298 = vmatpush1.msra.mxu0 0.0
    %2299 = vmatprep.subr.mxu0 0.0
    %2300 = vmatpush1.msra.mxu0 0.0
    %2301 = vmatprep.subr.mxu0 0.0
    %2302 = vmatpush1.msra.mxu0 0.0
    %2303 = vmatprep.subr.mxu0 0.0
    %2304 = vmatpush1.msra.mxu0 0.0
    %2305 = vmatprep.subr.mxu0 0.0
    %2306 = vmatpush1.msra.mxu0 0.0
    %2307 = vmatprep.subr.mxu0 0.0
    %2308 = vmatpush1.msra.mxu0 0.0
    %2309 = vmatprep.subr.mxu0 0.0
    %2310 = vmatpush1.msra.mxu0 0.0
    %2311 = vmatprep.subr.mxu0 0.0
    %2312 = vmatpush1.msra.mxu0 0.0
    %2313 = vmatprep.subr.mxu0 0.0
    %2314 = vmatpush1.msra.mxu0 0.0
    %2315 = vmatprep.subr.mxu0 0.0
    %2316 = vmatpush1.msra.mxu0 0.0
    %2317 = vmatprep.subr.mxu0 0.0
    %2318 = vmatpush1.msra.mxu0 0.0
    %2319 = vmatprep.subr.mxu0 0.0
    %2320 = vmatpush1.msra.mxu0 0.0
    %2321 = vmatprep.subr.mxu0 0.0
    %2322 = vmatpush1.msra.mxu0 %v2286
    %2323 = vmatprep.subr.mxu0 0.0
    %2324 = vmatpush2.msra.mxu0 0.0
    %2325 = vmatprep.subr.mxu0 0.0
    %2326 = vmatpush2.msra.mxu0 0.0
    %2327 = vmatprep.subr.mxu0 0.0
    %2328 = vmatpush2.msra.mxu0 0.0
    %2329 = vmatprep.subr.mxu0 0.0
    %2330 = vmatpush2.msra.mxu0 0.0
    %2331 = vmatprep.subr.mxu0 0.0
    %2332 = vmatpush2.msra.mxu0 0.0
    %2333 = vmatprep.subr.mxu0 0.0
    %2334 = vmatpush2.msra.mxu0 0.0
    %2335 = vmatprep.subr.mxu0 0.0
    %2336 = vmatpush2.msra.mxu0 0.0
    %2337 = vmatprep.subr.mxu0 0.0
    %2338 = vmatpush2.msra.mxu0 0.0
    %2339 = vmatprep.subr.mxu0 0.0
    %2340 = vmatpush2.msra.mxu0 0.0
    %2341 = vmatprep.subr.mxu0 0.0
    %2342 = vmatpush2.msra.mxu0 0.0
    %2343 = vmatprep.subr.mxu0 0.0
    %2344 = vmatpush2.msra.mxu0 0.0
    %2345 = vmatprep.subr.mxu0 0.0
    %2346 = vmatpush2.msra.mxu0 0.0
    %2347 = vmatprep.subr.mxu0 0.0
    %2348 = vmatpush2.msra.mxu0 0.0
    %2349 = vmatprep.subr.mxu0 0.0
    %2350 = vmatpush2.msra.mxu0 0.0
    %2351 = vmatprep.subr.mxu0 0.0
    %2352 = vmatpush2.msra.mxu0 0.0
    %2353 = vmatprep.subr.mxu0 0.0
    %2354 = vmatpush2.msra.mxu0 0.0
    %2355 = vmatprep.mubr.f32.mxu0 0.0
    %2356 = vmatmul.mubr.f32.gmra.mxu0 %v2289
    %v2357 = vpop.f32.mrf.mxu0
    %v2358 = vadd.f32 0.0, %v2357
    %v2359 = vpop.f32.mrf.mxu0
    %2360 = vdwg.mxu0
    %2361 = vrot.lane.b32.xlu0 %v129, 40
    %v2362 = vpop.permute.xlu0 %2361
    %v2365 = vsel %vm536, %v2278, 0
    %2367 = vmatprep.subr.mxu0 0.0
    %2368 = vmatpush1.msra.mxu0 0.0
    %2369 = vmatprep.subr.mxu0 0.0
    %2370 = vmatpush1.msra.mxu0 0.0
    %2371 = vmatprep.subr.mxu0 0.0
    %2372 = vmatpush1.msra.mxu0 0.0
    %2373 = vmatprep.subr.mxu0 0.0
    %2374 = vmatpush1.msra.mxu0 0.0
    %2375 = vmatprep.subr.mxu0 0.0
    %2376 = vmatpush1.msra.mxu0 0.0
    %2377 = vmatprep.subr.mxu0 0.0
    %2378 = vmatpush1.msra.mxu0 0.0
    %2379 = vmatprep.subr.mxu0 0.0
    %2380 = vmatpush1.msra.mxu0 0.0
    %2381 = vmatprep.subr.mxu0 0.0
    %2382 = vmatpush1.msra.mxu0 0.0
    %2383 = vmatprep.subr.mxu0 0.0
    %2384 = vmatpush1.msra.mxu0 0.0
    %2385 = vmatprep.subr.mxu0 0.0
    %2386 = vmatpush1.msra.mxu0 0.0
    %2387 = vmatprep.subr.mxu0 0.0
    %2388 = vmatpush1.msra.mxu0 0.0
    %2389 = vmatprep.subr.mxu0 0.0
    %2390 = vmatpush1.msra.mxu0 0.0
    %2391 = vmatprep.subr.mxu0 0.0
    %2392 = vmatpush1.msra.mxu0 0.0
    %2393 = vmatprep.subr.mxu0 0.0
    %2394 = vmatpush1.msra.mxu0 0.0
    %2395 = vmatprep.subr.mxu0 0.0
    %2396 = vmatpush1.msra.mxu0 0.0
    %2397 = vmatprep.subr.mxu0 0.0
    %2398 = vmatpush1.msra.mxu0 %v2362
    %2399 = vmatprep.subr.mxu0 0.0
    %2400 = vmatpush2.msra.mxu0 0.0
    %2401 = vmatprep.subr.mxu0 0.0
    %2402 = vmatpush2.msra.mxu0 0.0
    %2403 = vmatprep.subr.mxu0 0.0
    %2404 = vmatpush2.msra.mxu0 0.0
    %2405 = vmatprep.subr.mxu0 0.0
    %2406 = vmatpush2.msra.mxu0 0.0
    %2407 = vmatprep.subr.mxu0 0.0
    %2408 = vmatpush2.msra.mxu0 0.0
    %2409 = vmatprep.subr.mxu0 0.0
    %2410 = vmatpush2.msra.mxu0 0.0
    %2411 = vmatprep.subr.mxu0 0.0
    %2412 = vmatpush2.msra.mxu0 0.0
    %2413 = vmatprep.subr.mxu0 0.0
    %2414 = vmatpush2.msra.mxu0 0.0
    %2415 = vmatprep.subr.mxu0 0.0
    %2416 = vmatpush2.msra.mxu0 0.0
    %2417 = vmatprep.subr.mxu0 0.0
    %2418 = vmatpush2.msra.mxu0 0.0
    %2419 = vmatprep.subr.mxu0 0.0
    %2420 = vmatpush2.msra.mxu0 0.0
    %2421 = vmatprep.subr.mxu0 0.0
    %2422 = vmatpush2.msra.mxu0 0.0
    %2423 = vmatprep.subr.mxu0 0.0
    %2424 = vmatpush2.msra.mxu0 0.0
    %2425 = vmatprep.subr.mxu0 0.0
    %2426 = vmatpush2.msra.mxu0 0.0
    %2427 = vmatprep.subr.mxu0 0.0
    %2428 = vmatpush2.msra.mxu0 0.0
    %2429 = vmatprep.subr.mxu0 0.0
    %2430 = vmatpush2.msra.mxu0 0.0
    %2431 = vmatprep.mubr.f32.mxu0 0.0
    %2432 = vmatmul.mubr.f32.gmra.mxu0 %v2365
    %v2433 = vpop.f32.mrf.mxu0
    %v2434 = vadd.f32 0.0, %v2433
    %v2435 = vpop.f32.mrf.mxu0
    %2436 = vdwg.mxu0
    %v2437 = vrcp.pop %v2281
    %v2438 = vrcp.pop %v2284
    %v2439 = vmul.f32 %v2358, %v2437
    %v2440 = vmul.f32 %v2434, %v2438
    %2443 = vrot.lane.b32.xlu0 %v1287, 8
    %v2444 = vpop.permute.xlu0 %2443
    %2445 = vrot.lane.b32.xlu0 %v1288, 8
    %v2446 = vpop.permute.xlu0 %2445
    %2451 = vrot.lane.b32.xlu0 %v1863, 16
    %v2452 = vpop.permute.xlu0 %2451
    %2453 = vrot.lane.b32.xlu0 %v1864, 16
    %v2454 = vpop.permute.xlu0 %2453
    %2459 = vrot.lane.b32.xlu0 %v2439, 24
    %v2460 = vpop.permute.xlu0 %2459
    %2461 = vrot.lane.b32.xlu0 %v2440, 24
    %v2462 = vpop.permute.xlu0 %2461
    %v2465 = vsel %vm536, %v711, %v2444
    %v2466 = vsel %vm536, %v712, %v2446
    %vm2467 = vcmask 130048
    %v2468 = vsel %vm2467, %v2465, %v2452
    %v2469 = vsel %vm2467, %v2466, %v2454
    %vm2470 = vcmask 195584
    %v2471 = vsel %vm2470, %v2468, %v2460
    %v2472 = vsel %vm2470, %v2469, %v2462
    %v2473 = vld [vmem:[%s2] sm:$0xff]
    %v2474 = vld [vmem:[%s2 + $0x8] sm:$0xff]
    %v2475 = vld [vmem:[%s2 + $0x10] sm:$0xff]
    %v2476 = vld [vmem:[%s2 + $0x18] sm:$0xff]
    %v2478 = vsel %vm31, %v2471, 0
    %v2481 = vsel %vm31, %v2472, 0
    %2483 = vmatprep.subr.mxu0 0.0
    %2484 = vmatpush1.msra.mxu0 0.0
    %2485 = vmatprep.subr.mxu0 0.0
    %2486 = vmatpush1.msra.mxu0 0.0
    %2487 = vmatprep.subr.mxu0 0.0
    %2488 = vmatpush1.msra.mxu0 0.0
    %2489 = vmatprep.subr.mxu0 0.0
    %2490 = vmatpush1.msra.mxu0 0.0
    %2491 = vmatprep.subr.mxu0 0.0
    %2492 = vmatpush1.msra.mxu0 0.0
    %2493 = vmatprep.subr.mxu0 0.0
    %2494 = vmatpush1.msra.mxu0 0.0
    %2495 = vmatprep.subr.mxu0 0.0
    %2496 = vmatpush1.msra.mxu0 0.0
    %2497 = vmatprep.subr.mxu0 0.0
    %2498 = vmatpush1.msra.mxu0 0.0
    %2499 = vmatprep.subr.mxu0 0.0
    %2500 = vmatpush1.msra.mxu0 0.0
    %2501 = vmatprep.subr.mxu0 0.0
    %2502 = vmatpush1.msra.mxu0 0.0
    %2503 = vmatprep.subr.mxu0 0.0
    %2504 = vmatpush1.msra.mxu0 0.0
    %2505 = vmatprep.subr.mxu0 0.0
    %2506 = vmatpush1.msra.mxu0 0.0
    %2507 = vmatprep.subr.mxu0 0.0
    %2508 = vmatpush1.msra.mxu0 %v2476
    %2509 = vmatprep.subr.mxu0 0.0
    %2510 = vmatpush1.msra.mxu0 %v2475
    %2511 = vmatprep.subr.mxu0 0.0
    %2512 = vmatpush1.msra.mxu0 %v2474
    %2513 = vmatprep.subr.mxu0 0.0
    %2514 = vmatpush1.msra.mxu0 %v2473
    %2515 = vmatprep.subr.mxu0 0.0
    %2516 = vmatpush2.msra.mxu0 0.0
    %2517 = vmatprep.subr.mxu0 0.0
    %2518 = vmatpush2.msra.mxu0 0.0
    %2519 = vmatprep.subr.mxu0 0.0
    %2520 = vmatpush2.msra.mxu0 0.0
    %2521 = vmatprep.subr.mxu0 0.0
    %2522 = vmatpush2.msra.mxu0 0.0
    %2523 = vmatprep.subr.mxu0 0.0
    %2524 = vmatpush2.msra.mxu0 0.0
    %2525 = vmatprep.subr.mxu0 0.0
    %2526 = vmatpush2.msra.mxu0 0.0
    %2527 = vmatprep.subr.mxu0 0.0
    %2528 = vmatpush2.msra.mxu0 0.0
    %2529 = vmatprep.subr.mxu0 0.0
    %2530 = vmatpush2.msra.mxu0 0.0
    %2531 = vmatprep.subr.mxu0 0.0
    %2532 = vmatpush2.msra.mxu0 0.0
    %2533 = vmatprep.subr.mxu0 0.0
    %2534 = vmatpush2.msra.mxu0 0.0
    %2535 = vmatprep.subr.mxu0 0.0
    %2536 = vmatpush2.msra.mxu0 0.0
    %2537 = vmatprep.subr.mxu0 0.0
    %2538 = vmatpush2.msra.mxu0 0.0
    %2539 = vmatprep.subr.mxu0 0.0
    %2540 = vmatpush2.msra.mxu0 0.0
    %2541 = vmatprep.subr.mxu0 0.0
    %2542 = vmatpush2.msra.mxu0 0.0
    %2543 = vmatprep.subr.mxu0 0.0
    %2544 = vmatpush2.msra.mxu0 0.0
    %2545 = vmatprep.subr.mxu0 0.0
    %2546 = vmatpush2.msra.mxu0 0.0
    %2547 = vmatprep.mubr.f32.mxu0 0.0
    %2548 = vmatmul.mubr.f32.gmra.mxu0 %v2478
    %v2549 = vpop.f32.mrf.mxu0
    %v2550 = vadd.f32 0.0, %v2549
    %v2551 = vpop.f32.mrf.mxu0
    %2552 = vmatprep.mubr.f32.mxu0 0.0
    %2553 = vmatmul.mubr.f32.gmra.mxu0 %v2481
    %v2554 = vpop.f32.mrf.mxu0
    %v2555 = vadd.f32 0.0, %v2554
    %v2556 = vpop.f32.mrf.mxu0
    %2557 = vdwg.mxu0
    %v2558 = vadd.f32 %v27, %v2550
    %v2559 = vadd.f32 %v28, %v2555
    %v2560 = vmul.f32 %v2558, %v2558
    %v2561 = vmul.f32 %v2559, %v2559
    %v2562 = vsel %vm31, %v2560, 0.0
    %2563 = vadd.xlane.f32.xlu0 %v2562
    %v2564 = vpop.xlane.xlu0 %2563
    %v2565 = vsel %vm31, %v2561, 0.0
    %2566 = vadd.xlane.f32.xlu0 %v2565
    %v2567 = vpop.xlane.xlu0 %2566
    %v2568 = vmul.f32 %v2564, %v38
    %v2569 = vmul.f32 %v2567, %v38
    %v2570 = vadd.f32 %v2568, 1e-06
    %v2571 = vadd.f32 %v2569, 1e-06
    %v2572 = vrsqrt.pop %v2570
    %v2573 = vrsqrt.pop %v2571
    %v2574 = vmul.f32 %v2558, %v2572
    %v2575 = vmul.f32 %v2559, %v2573
    %v2576 = vld [vmem:[%s3] sm:$0xff]
    %v2577 = vld [vmem:[%s3 + $0x8] sm:$0xff]
    %v2578 = vld [vmem:[%s3 + $0x10] sm:$0xff]
    %v2579 = vld [vmem:[%s3 + $0x18] sm:$0xff]
    %v2581 = vsel %vm31, %v2574, 0
    %v2584 = vsel %vm31, %v2575, 0
    %2586 = vmatprep.subr.mxu0 0.0
    %2587 = vmatpush1.msra.mxu0 0.0
    %2588 = vmatprep.subr.mxu0 0.0
    %2589 = vmatpush1.msra.mxu0 0.0
    %2590 = vmatprep.subr.mxu0 0.0
    %2591 = vmatpush1.msra.mxu0 0.0
    %2592 = vmatprep.subr.mxu0 0.0
    %2593 = vmatpush1.msra.mxu0 0.0
    %2594 = vmatprep.subr.mxu0 0.0
    %2595 = vmatpush1.msra.mxu0 0.0
    %2596 = vmatprep.subr.mxu0 0.0
    %2597 = vmatpush1.msra.mxu0 0.0
    %2598 = vmatprep.subr.mxu0 0.0
    %2599 = vmatpush1.msra.mxu0 0.0
    %2600 = vmatprep.subr.mxu0 0.0
    %2601 = vmatpush1.msra.mxu0 0.0
    %2602 = vmatprep.subr.mxu0 0.0
    %2603 = vmatpush1.msra.mxu0 0.0
    %2604 = vmatprep.subr.mxu0 0.0
    %2605 = vmatpush1.msra.mxu0 0.0
    %2606 = vmatprep.subr.mxu0 0.0
    %2607 = vmatpush1.msra.mxu0 0.0
    %2608 = vmatprep.subr.mxu0 0.0
    %2609 = vmatpush1.msra.mxu0 0.0
    %2610 = vmatprep.subr.mxu0 0.0
    %2611 = vmatpush1.msra.mxu0 %v2579
    %2612 = vmatprep.subr.mxu0 0.0
    %2613 = vmatpush1.msra.mxu0 %v2578
    %2614 = vmatprep.subr.mxu0 0.0
    %2615 = vmatpush1.msra.mxu0 %v2577
    %2616 = vmatprep.subr.mxu0 0.0
    %2617 = vmatpush1.msra.mxu0 %v2576
    %2618 = vmatprep.subr.mxu0 0.0
    %2619 = vmatpush2.msra.mxu0 0.0
    %2620 = vmatprep.subr.mxu0 0.0
    %2621 = vmatpush2.msra.mxu0 0.0
    %2622 = vmatprep.subr.mxu0 0.0
    %2623 = vmatpush2.msra.mxu0 0.0
    %2624 = vmatprep.subr.mxu0 0.0
    %2625 = vmatpush2.msra.mxu0 0.0
    %2626 = vmatprep.subr.mxu0 0.0
    %2627 = vmatpush2.msra.mxu0 0.0
    %2628 = vmatprep.subr.mxu0 0.0
    %2629 = vmatpush2.msra.mxu0 0.0
    %2630 = vmatprep.subr.mxu0 0.0
    %2631 = vmatpush2.msra.mxu0 0.0
    %2632 = vmatprep.subr.mxu0 0.0
    %2633 = vmatpush2.msra.mxu0 0.0
    %2634 = vmatprep.subr.mxu0 0.0
    %2635 = vmatpush2.msra.mxu0 0.0
    %2636 = vmatprep.subr.mxu0 0.0
    %2637 = vmatpush2.msra.mxu0 0.0
    %2638 = vmatprep.subr.mxu0 0.0
    %2639 = vmatpush2.msra.mxu0 0.0
    %2640 = vmatprep.subr.mxu0 0.0
    %2641 = vmatpush2.msra.mxu0 0.0
    %2642 = vmatprep.subr.mxu0 0.0
    %2643 = vmatpush2.msra.mxu0 0.0
    %2644 = vmatprep.subr.mxu0 0.0
    %2645 = vmatpush2.msra.mxu0 0.0
    %2646 = vmatprep.subr.mxu0 0.0
    %2647 = vmatpush2.msra.mxu0 0.0
    %2648 = vmatprep.subr.mxu0 0.0
    %2649 = vmatpush2.msra.mxu0 0.0
    %2650 = vmatprep.mubr.f32.mxu0 0.0
    %2651 = vmatmul.mubr.f32.gmra.mxu0 %v2581
    %v2652 = vpop.f32.mrf.mxu0
    %v2653 = vadd.f32 0.0, %v2652
    %v2654 = vpop.f32.mrf.mxu0
    %2655 = vmatprep.mubr.f32.mxu0 0.0
    %2656 = vmatmul.mubr.f32.gmra.mxu0 %v2584
    %v2657 = vpop.f32.mrf.mxu0
    %v2658 = vadd.f32 0.0, %v2657
    %v2659 = vpop.f32.mrf.mxu0
    %2660 = vdwg.mxu0
    %v2661 = vmul.f32 %v2653, 0.5
    %v2662 = vmul.f32 %v2658, 0.5
    %v2663 = vmul.f32 %v2653, 0.70710677
    %v2664 = vmul.f32 %v2658, 0.70710677
    %v2665 = verf.f32.pop %v2663
    %v2666 = verf.f32.pop %v2664
    %v2667 = vadd.f32 %v2665, 1.0
    %v2668 = vadd.f32 %v2666, 1.0
    %v2669 = vmul.f32 %v2661, %v2667
    %v2670 = vmul.f32 %v2662, %v2668
    %v2671 = vld [vmem:[%s4] sm:$0xff]
    %v2672 = vld [vmem:[%s4 + $0x8] sm:$0xff]
    %v2673 = vld [vmem:[%s4 + $0x10] sm:$0xff]
    %v2674 = vld [vmem:[%s4 + $0x18] sm:$0xff]
    %v2675 = vld [vmem:[%s4 + $0x20] sm:$0xff]
    %v2676 = vld [vmem:[%s4 + $0x28] sm:$0xff]
    %v2677 = vld [vmem:[%s4 + $0x30] sm:$0xff]
    %v2678 = vld [vmem:[%s4 + $0x38] sm:$0xff]
    %v2679 = vld [vmem:[%s4 + $0x40] sm:$0xff]
    %v2680 = vld [vmem:[%s4 + $0x48] sm:$0xff]
    %v2681 = vld [vmem:[%s4 + $0x50] sm:$0xff]
    %v2682 = vld [vmem:[%s4 + $0x58] sm:$0xff]
    %v2683 = vld [vmem:[%s4 + $0x60] sm:$0xff]
    %v2684 = vld [vmem:[%s4 + $0x68] sm:$0xff]
    %v2685 = vld [vmem:[%s4 + $0x70] sm:$0xff]
    %v2686 = vld [vmem:[%s4 + $0x78] sm:$0xff]
    %2687 = vmatprep.subr.mxu0 0.0
    %2688 = vmatpush1.msra.mxu0 %v2686
    %2689 = vmatprep.subr.mxu0 0.0
    %2690 = vmatpush1.msra.mxu0 %v2685
    %2691 = vmatprep.subr.mxu0 0.0
    %2692 = vmatpush1.msra.mxu0 %v2684
    %2693 = vmatprep.subr.mxu0 0.0
    %2694 = vmatpush1.msra.mxu0 %v2683
    %2695 = vmatprep.subr.mxu0 0.0
    %2696 = vmatpush1.msra.mxu0 %v2682
    %2697 = vmatprep.subr.mxu0 0.0
    %2698 = vmatpush1.msra.mxu0 %v2681
    %2699 = vmatprep.subr.mxu0 0.0
    %2700 = vmatpush1.msra.mxu0 %v2680
    %2701 = vmatprep.subr.mxu0 0.0
    %2702 = vmatpush1.msra.mxu0 %v2679
    %2703 = vmatprep.subr.mxu0 0.0
    %2704 = vmatpush1.msra.mxu0 %v2678
    %2705 = vmatprep.subr.mxu0 0.0
    %2706 = vmatpush1.msra.mxu0 %v2677
    %2707 = vmatprep.subr.mxu0 0.0
    %2708 = vmatpush1.msra.mxu0 %v2676
    %2709 = vmatprep.subr.mxu0 0.0
    %2710 = vmatpush1.msra.mxu0 %v2675
    %2711 = vmatprep.subr.mxu0 0.0
    %2712 = vmatpush1.msra.mxu0 %v2674
    %2713 = vmatprep.subr.mxu0 0.0
    %2714 = vmatpush1.msra.mxu0 %v2673
    %2715 = vmatprep.subr.mxu0 0.0
    %2716 = vmatpush1.msra.mxu0 %v2672
    %2717 = vmatprep.subr.mxu0 0.0
    %2718 = vmatpush1.msra.mxu0 %v2671
    %2719 = vmatprep.subr.mxu0 0.0
    %2720 = vmatpush2.msra.mxu0 0.0
    %2721 = vmatprep.subr.mxu0 0.0
    %2722 = vmatpush2.msra.mxu0 0.0
    %2723 = vmatprep.subr.mxu0 0.0
    %2724 = vmatpush2.msra.mxu0 0.0
    %2725 = vmatprep.subr.mxu0 0.0
    %2726 = vmatpush2.msra.mxu0 0.0
    %2727 = vmatprep.subr.mxu0 0.0
    %2728 = vmatpush2.msra.mxu0 0.0
    %2729 = vmatprep.subr.mxu0 0.0
    %2730 = vmatpush2.msra.mxu0 0.0
    %2731 = vmatprep.subr.mxu0 0.0
    %2732 = vmatpush2.msra.mxu0 0.0
    %2733 = vmatprep.subr.mxu0 0.0
    %2734 = vmatpush2.msra.mxu0 0.0
    %2735 = vmatprep.subr.mxu0 0.0
    %2736 = vmatpush2.msra.mxu0 0.0
    %2737 = vmatprep.subr.mxu0 0.0
    %2738 = vmatpush2.msra.mxu0 0.0
    %2739 = vmatprep.subr.mxu0 0.0
    %2740 = vmatpush2.msra.mxu0 0.0
    %2741 = vmatprep.subr.mxu0 0.0
    %2742 = vmatpush2.msra.mxu0 0.0
    %2743 = vmatprep.subr.mxu0 0.0
    %2744 = vmatpush2.msra.mxu0 0.0
    %2745 = vmatprep.subr.mxu0 0.0
    %2746 = vmatpush2.msra.mxu0 0.0
    %2747 = vmatprep.subr.mxu0 0.0
    %2748 = vmatpush2.msra.mxu0 0.0
    %2749 = vmatprep.subr.mxu0 0.0
    %2750 = vmatpush2.msra.mxu0 0.0
    %2751 = vmatprep.mubr.f32.mxu0 0.0
    %2752 = vmatmul.mubr.f32.gmra.mxu0 %v2669
    %v2753 = vpop.f32.mrf.mxu0
    %v2754 = vadd.f32 0.0, %v2753
    %v2755 = vpop.f32.mrf.mxu0
    %2756 = vmatprep.mubr.f32.mxu0 0.0
    %2757 = vmatmul.mubr.f32.gmra.mxu0 %v2670
    %v2758 = vpop.f32.mrf.mxu0
    %v2759 = vadd.f32 0.0, %v2758
    %v2760 = vpop.f32.mrf.mxu0
    %2761 = vdwg.mxu0
    %v2762 = vadd.f32 %v2558, %v2754
    %v2763 = vadd.f32 %v2559, %v2759
    %2764 = vst.msk [vmem:[#allocation2] sm:$0xff] %vm31, %v2762
    %2765 = vst.msk [vmem:[#allocation2 + $0x8] sm:$0xff] %vm31, %v2763
    // Predicated region
    $region30: #{block_forward.1} parent=1 // pred_check
      _
    $region31: #{block_forward.1} parent=1 // pred_check_branch
      %2767 = sbr.rel (0) target = $region33
    $region32: #{block_forward.1} parent=1 // pred_region
      %s2769 = ssub.s32 256, 256
      %2770 = vsyncadd [#allocation3], %s2769
      %s2771 = sshll.u32 [#allocation2], 4
      %s2772 = int_to_ptr.vmem [resolvable:$true] %s2771
      %2777 = dma.vmem_to_hbm [thread:$0]  %s2772, 256, %s7, [#allocation3], 128, 128, 8
    $region33: #{block_forward.1} parent=1 // pred_fallthru
      _
    // Predicated region
    $region34: #{block_forward.1} parent=1 // pred_check
      _
    $region35: #{block_forward.1} parent=1 // pred_check_branch
      %2779 = sbr.rel (0) target = $region37
    $region36: #{block_forward.1} parent=1 // pred_region
      %2780 = dma.done [#allocation3], 256
    $region37: #{block_forward.1} parent=1 // pred_fallthru
      _
    %2781 = vsyncpa [#allocation3], 1

</llo_original>
